<compile_context>
chip_gen: v6e
topology: v6e:2x2x1
jax: 0.10.0
libtpu: 0.0.40
codegen_flags: <defaults>
</compile_context>

<pallas_src>
import jax
import jax.numpy as jnp
import numpy as np
from jax.experimental import pallas as pl
from jax.experimental.pallas import tpu as pltpu

HIDDEN = 320


def rnn_fc_kernel(x_ref, w_ih_ref, w_hh_ref, b_ref, w_head_ref, b_head_ref,
                  out_ref):
    B, C = out_ref.shape
    TB, D = x_ref.shape
    H = w_hh_ref.shape[0]
    T = TB // B

    # --- hoisted input projection (off the serial chain): one big-M matmul ---
    # gi[t*B:(t+1)*B] = x_t @ W_ih^T + (b_ih + b_hh)
    gi = jnp.dot(x_ref[...], w_ih_ref[...],
                 preferred_element_type=jnp.float32) + b_ref[...]        # (T*B, H)

    w_hh = w_hh_ref[...]                                                 # (H, H)

    # --- tanh RNN recurrence, fully unrolled (T is static at trace time) ---
    h = jnp.zeros((B, H), dtype=jnp.float32)
    for t in range(T):
        gi_t = gi[t * B:(t + 1) * B, :]                                  # static slice
        h = jnp.tanh(gi_t + jnp.dot(h, w_hh,
                                    preferred_element_type=jnp.float32))

    # --- fused fc head + softmax (Dropout is identity at inference) ---
    y = jnp.dot(h, w_head_ref[...],
                preferred_element_type=jnp.float32) + b_head_ref[...]    # (B, C)
    y = y - jnp.max(y, axis=1, keepdims=True)
    e = jnp.exp(y)
    out_ref[...] = e / jnp.sum(e, axis=1, keepdims=True)


def rnn_model_forward(tokens, params):
    """tokens: (B, T, D) float32 — the base_model's last_hidden_state."""
    B, T, D = tokens.shape
    H = HIDDEN
    C = params["w3"].shape[0]

    # time-major, flattened so the kernel's input projection is a single matmul
    x2d = jnp.transpose(tokens, (1, 0, 2)).reshape(T * B, D)             # (T*B, D)

    # fold the two RNN biases (added once in the hoisted projection)
    b = (params["b_ih"] + params["b_hh"]).reshape(1, H)                  # (1, H)

    # fold the three head Linears into a single (H, C) linear (exact same math
    # up to fp32 rounding; Dropout between them is identity at inference)
    w1t, w2t, w3t = params["w1"].T, params["w2"].T, params["w3"].T       # (H,80),(80,20),(20,C)
    w_head = w1t @ w2t @ w3t                                             # (H, C)
    b_head = ((params["b1"] @ w2t + params["b2"]) @ w3t
              + params["b3"]).reshape(1, C)                              # (1, C)

    args = (
        x2d,
        params["w_ih"].T,                                                # (D, H)
        params["w_hh"].T,                                                # (H, H)
        b,                                                               # (1, H)
        w_head,                                                          # (H, C)
        b_head,                                                          # (1, C)
    )

    cost = pl.CostEstimate(
        flops=2 * T * B * D * H + 2 * T * B * H * H + 2 * B * H * C,
        transcendentals=T * B * H + B * C,
        bytes_accessed=4 * (T * B * D + D * H + H * H + H + H * C + C + B * C),
    )

    return pl.pallas_call(
        rnn_fc_kernel,
        out_shape=jax.ShapeDtypeStruct((B, C), jnp.float32),
        # small problem: all operands resident in VMEM, single grid point
        in_specs=[pl.BlockSpec(memory_space=pltpu.MemorySpace.VMEM)] * len(args),
        out_specs=pl.BlockSpec(memory_space=pltpu.MemorySpace.VMEM),
        cost_estimate=cost,
    )(*args)


def init_params(key, input_size, hidden, num_classes):
    """Deterministic init mimicking PyTorch's default uniform(-1/sqrt(fan), 1/sqrt(fan))."""
    ks = jax.random.split(key, 12)

    def u(k, shape, s):
        return jax.random.uniform(k, shape, jnp.float32, -s, s)

    sg = 1.0 / np.sqrt(hidden)
    return {
        # nn.RNN (tanh) parameters
        "w_ih": u(ks[0], (hidden, input_size), sg),
        "w_hh": u(ks[1], (hidden, hidden), sg),
        "b_ih": u(ks[2], (hidden,), sg),
        "b_hh": u(ks[3], (hidden,), sg),
        # fc head
        "w1": u(ks[4], (80, hidden), 1.0 / np.sqrt(hidden)),
        "b1": u(ks[5], (80,), 1.0 / np.sqrt(hidden)),
        "w2": u(ks[6], (20, 80), 1.0 / np.sqrt(80)),
        "b2": u(ks[7], (20,), 1.0 / np.sqrt(80)),
        "w3": u(ks[8], (num_classes, 20), 1.0 / np.sqrt(20)),
        "b3": u(ks[9], (num_classes,), 1.0 / np.sqrt(20)),
    }


def reference_forward(tokens, params):
    """Pure-JAX reference of the same math (PyTorch nn.RNN tanh semantics)."""
    B, T, D = tokens.shape
    H = HIDDEN
    h = jnp.zeros((B, H), jnp.float32)
    for t in range(T):
        x_t = tokens[:, t, :]
        h = jnp.tanh(x_t @ params["w_ih"].T + params["b_ih"]
                     + h @ params["w_hh"].T + params["b_hh"])
    y = h @ params["w1"].T + params["b1"]
    y = y @ params["w2"].T + params["b2"]
    y = y @ params["w3"].T + params["b3"]
    return jax.nn.softmax(y, axis=1)


if __name__ == "__main__":
    B, T, D, C = 2, 8, 32, 4  # batch, seq, input_size, num_classes

    key = jax.random.PRNGKey(0)
    k_tok, k_par = jax.random.split(key)
    tokens = jax.random.normal(k_tok, (B, T, D), jnp.float32)
    params = init_params(k_par, D, HIDDEN, C)

    out = rnn_model_forward(tokens, params)
    out = jax.block_until_ready(out)

    ref = reference_forward(tokens, params)
    np.testing.assert_allclose(np.asarray(out), np.asarray(ref), rtol=1e-3, atol=1e-4)
    assert out.shape == (B, C)

    print("KERNEL_OK")
</pallas_src>

<mosaic_0001>
module attributes {stable_mosaic.version = 11 : i64} {
  func.func @rnn_fc_kernel(%arg0: memref<16x32xf32, #tpu.memory_space<vmem>>, %arg1: memref<32x320xf32, #tpu.memory_space<vmem>>, %arg2: memref<320x320xf32, #tpu.memory_space<vmem>>, %arg3: memref<1x320xf32, #tpu.memory_space<vmem>>, %arg4: memref<320x4xf32, #tpu.memory_space<vmem>>, %arg5: memref<1x4xf32, #tpu.memory_space<vmem>>, %arg6: memref<2x4xf32, #tpu.memory_space<vmem>>) attributes {dimension_semantics = [], scalar_prefetch = 0 : i64, scratch_operands = 0 : i64, tpu.core_type = #tpu.core_type<tc>} {
    %c0 = arith.constant 0 : index
    %c0_0 = arith.constant 0 : index
    %0 = vector.load %arg0[%c0, %c0_0] : memref<16x32xf32, #tpu.memory_space<vmem>>, vector<16x32xf32>
    %c0_1 = arith.constant 0 : index
    %c0_2 = arith.constant 0 : index
    %1 = vector.load %arg1[%c0_1, %c0_2] : memref<32x320xf32, #tpu.memory_space<vmem>>, vector<32x320xf32>
    %cst = arith.constant dense<0.000000e+00> : vector<16x320xf32>
    %2 = tpu.matmul %0, %1, %cst {dimension_numbers = #tpu.dot_dimension_numbers<[1], [0], [0], [1], [0, 0, 1, 1], [], []>} : vector<16x32xf32>, vector<32x320xf32>, vector<16x320xf32> -> vector<16x320xf32>
    %c0_3 = arith.constant 0 : index
    %c0_4 = arith.constant 0 : index
    %3 = vector.load %arg3[%c0_3, %c0_4] : memref<1x320xf32, #tpu.memory_space<vmem>>, vector<1x320xf32>
    %4 = vector.broadcast %3 : vector<1x320xf32> to vector<16x320xf32>
    %5 = arith.addf %2, %4 : vector<16x320xf32>
    %c0_5 = arith.constant 0 : index
    %c0_6 = arith.constant 0 : index
    %6 = vector.load %arg2[%c0_5, %c0_6] : memref<320x320xf32, #tpu.memory_space<vmem>>, vector<320x320xf32>
    %cst_7 = arith.constant 0.000000e+00 : f32
    %7 = vector.broadcast %cst_7 : f32 to vector<2x320xf32>
    %8 = vector.extract_strided_slice %5 {offsets = [0, 0], sizes = [2, 320], strides = [1, 1]} : vector<16x320xf32> to vector<2x320xf32>
    %cst_8 = arith.constant dense<0.000000e+00> : vector<2x320xf32>
    %9 = tpu.matmul %7, %6, %cst_8 {dimension_numbers = #tpu.dot_dimension_numbers<[1], [0], [0], [1], [0, 0, 1, 1], [], []>} : vector<2x320xf32>, vector<320x320xf32>, vector<2x320xf32> -> vector<2x320xf32>
    %10 = arith.addf %8, %9 : vector<2x320xf32>
    %11 = math.tanh %10 : vector<2x320xf32>
    %12 = vector.extract_strided_slice %5 {offsets = [2, 0], sizes = [2, 320], strides = [1, 1]} : vector<16x320xf32> to vector<2x320xf32>
    %cst_9 = arith.constant dense<0.000000e+00> : vector<2x320xf32>
    %13 = tpu.matmul %11, %6, %cst_9 {dimension_numbers = #tpu.dot_dimension_numbers<[1], [0], [0], [1], [0, 0, 1, 1], [], []>} : vector<2x320xf32>, vector<320x320xf32>, vector<2x320xf32> -> vector<2x320xf32>
    %14 = arith.addf %12, %13 : vector<2x320xf32>
    %15 = math.tanh %14 : vector<2x320xf32>
    %16 = vector.extract_strided_slice %5 {offsets = [4, 0], sizes = [2, 320], strides = [1, 1]} : vector<16x320xf32> to vector<2x320xf32>
    %cst_10 = arith.constant dense<0.000000e+00> : vector<2x320xf32>
    %17 = tpu.matmul %15, %6, %cst_10 {dimension_numbers = #tpu.dot_dimension_numbers<[1], [0], [0], [1], [0, 0, 1, 1], [], []>} : vector<2x320xf32>, vector<320x320xf32>, vector<2x320xf32> -> vector<2x320xf32>
    %18 = arith.addf %16, %17 : vector<2x320xf32>
    %19 = math.tanh %18 : vector<2x320xf32>
    %20 = vector.extract_strided_slice %5 {offsets = [6, 0], sizes = [2, 320], strides = [1, 1]} : vector<16x320xf32> to vector<2x320xf32>
    %cst_11 = arith.constant dense<0.000000e+00> : vector<2x320xf32>
    %21 = tpu.matmul %19, %6, %cst_11 {dimension_numbers = #tpu.dot_dimension_numbers<[1], [0], [0], [1], [0, 0, 1, 1], [], []>} : vector<2x320xf32>, vector<320x320xf32>, vector<2x320xf32> -> vector<2x320xf32>
    %22 = arith.addf %20, %21 : vector<2x320xf32>
    %23 = math.tanh %22 : vector<2x320xf32>
    %24 = vector.extract_strided_slice %5 {offsets = [8, 0], sizes = [2, 320], strides = [1, 1]} : vector<16x320xf32> to vector<2x320xf32>
    %cst_12 = arith.constant dense<0.000000e+00> : vector<2x320xf32>
    %25 = tpu.matmul %23, %6, %cst_12 {dimension_numbers = #tpu.dot_dimension_numbers<[1], [0], [0], [1], [0, 0, 1, 1], [], []>} : vector<2x320xf32>, vector<320x320xf32>, vector<2x320xf32> -> vector<2x320xf32>
    %26 = arith.addf %24, %25 : vector<2x320xf32>
    %27 = math.tanh %26 : vector<2x320xf32>
    %28 = vector.extract_strided_slice %5 {offsets = [10, 0], sizes = [2, 320], strides = [1, 1]} : vector<16x320xf32> to vector<2x320xf32>
    %cst_13 = arith.constant dense<0.000000e+00> : vector<2x320xf32>
    %29 = tpu.matmul %27, %6, %cst_13 {dimension_numbers = #tpu.dot_dimension_numbers<[1], [0], [0], [1], [0, 0, 1, 1], [], []>} : vector<2x320xf32>, vector<320x320xf32>, vector<2x320xf32> -> vector<2x320xf32>
    %30 = arith.addf %28, %29 : vector<2x320xf32>
    %31 = math.tanh %30 : vector<2x320xf32>
    %32 = vector.extract_strided_slice %5 {offsets = [12, 0], sizes = [2, 320], strides = [1, 1]} : vector<16x320xf32> to vector<2x320xf32>
    %cst_14 = arith.constant dense<0.000000e+00> : vector<2x320xf32>
    %33 = tpu.matmul %31, %6, %cst_14 {dimension_numbers = #tpu.dot_dimension_numbers<[1], [0], [0], [1], [0, 0, 1, 1], [], []>} : vector<2x320xf32>, vector<320x320xf32>, vector<2x320xf32> -> vector<2x320xf32>
    %34 = arith.addf %32, %33 : vector<2x320xf32>
    %35 = math.tanh %34 : vector<2x320xf32>
    %36 = vector.extract_strided_slice %5 {offsets = [14, 0], sizes = [2, 320], strides = [1, 1]} : vector<16x320xf32> to vector<2x320xf32>
    %cst_15 = arith.constant dense<0.000000e+00> : vector<2x320xf32>
    %37 = tpu.matmul %35, %6, %cst_15 {dimension_numbers = #tpu.dot_dimension_numbers<[1], [0], [0], [1], [0, 0, 1, 1], [], []>} : vector<2x320xf32>, vector<320x320xf32>, vector<2x320xf32> -> vector<2x320xf32>
    %38 = arith.addf %36, %37 : vector<2x320xf32>
    %39 = math.tanh %38 : vector<2x320xf32>
    %c0_16 = arith.constant 0 : index
    %c0_17 = arith.constant 0 : index
    %40 = vector.load %arg4[%c0_16, %c0_17] : memref<320x4xf32, #tpu.memory_space<vmem>>, vector<320x4xf32>
    %cst_18 = arith.constant dense<0.000000e+00> : vector<2x4xf32>
    %41 = tpu.matmul %39, %40, %cst_18 {dimension_numbers = #tpu.dot_dimension_numbers<[1], [0], [0], [1], [0, 0, 1, 1], [], []>} : vector<2x320xf32>, vector<320x4xf32>, vector<2x4xf32> -> vector<2x4xf32>
    %c0_19 = arith.constant 0 : index
    %c0_20 = arith.constant 0 : index
    %42 = vector.load %arg5[%c0_19, %c0_20] : memref<1x4xf32, #tpu.memory_space<vmem>>, vector<1x4xf32>
    %43 = vector.broadcast %42 : vector<1x4xf32> to vector<2x4xf32>
    %44 = arith.addf %41, %43 : vector<2x4xf32>
    %cst_21 = arith.constant dense<0xFF800000> : vector<2xf32>
    %45 = vector.multi_reduction <maximumf>, %44, %cst_21 [1] : vector<2x4xf32> to vector<2xf32>
    %46 = vector.shape_cast %45 : vector<2xf32> to vector<2x1xf32>
    %47 = vector.broadcast %46 : vector<2x1xf32> to vector<2x4xf32>
    %48 = arith.subf %44, %47 : vector<2x4xf32>
    %49 = math.exp %48 : vector<2x4xf32>
    %cst_22 = arith.constant dense<0.000000e+00> : vector<2xf32>
    %50 = vector.multi_reduction <add>, %49, %cst_22 [1] : vector<2x4xf32> to vector<2xf32>
    %51 = vector.shape_cast %50 : vector<2xf32> to vector<2x1xf32>
    %52 = vector.broadcast %51 : vector<2x1xf32> to vector<2x4xf32>
    %53 = arith.divf %49, %52 : vector<2x4xf32>
    %c0_23 = arith.constant 0 : index
    %c0_24 = arith.constant 0 : index
    %54 = vector.load %arg6[%c0_23, %c0_24] : memref<2x4xf32, #tpu.memory_space<vmem>>, vector<2x4xf32>
    tpu.vector_store %arg6[%c0_23, %c0_24], %53 {strides = array<i32>} : memref<2x4xf32, #tpu.memory_space<vmem>>, vector<2x4xf32>,
    return
  }
}

</mosaic_0001>

<llo_original>
// kernel: tpu_custom_call.1
$region0: #{tpu_custom_call.1}
  #allocation0 [shape = 'u32[]', space=smem, size = 0x4, offset = 0x4, fixed_abs, tag = 'smem constant byte address 0x4 - core index']
  #allocation1 [shape = 'u32[144,128]{1,0:T(1,128)}', space=vmem, size = 0x12000, scoped, tag = 'internal scratch']
  %s0 = inlined_call_operand.vmem [shape: f32[16,32], index: 0, kind: input, shape index: {}]
  %s1 = inlined_call_operand.vmem [shape: f32[32,320], index: 1, kind: input, shape index: {}]
  %s2 = inlined_call_operand.hbm [shape: f32[320,320], index: 2, kind: input, shape index: {}]
  %s3 = inlined_call_operand.vmem [shape: f32[1,320], index: 3, kind: input, shape index: {}]
  %s4 = inlined_call_operand.vmem [shape: f32[320,4], index: 4, kind: input, shape index: {}]
  %s5 = inlined_call_operand.vmem [shape: f32[1,4], index: 5, kind: input, shape index: {}]
  %s6 = inlined_call_operand.hbm [shape: f32[2,4], index: 6, kind: output, shape index: {}]
  %s7 = sld [smem:[#allocation0]]
  $region38: #{tpu_custom_call.1} parent=0
    _
  %s9 = ssub.s32 1, %s7
  %s10 = scalar_select 0, %s9, %s7
  $region1: #{tpu_custom_call.1} parent=0
    #allocation2 [shape = 'u8[491520]{0}', space=vmem, size = 0x78000, scoped, tag = 'input window, operand 2, single buffered']
    #allocation3 [shape = 's32[1]{0}', space=sflag, size = 0x4, scoped, tag = 'scoped memory for tpu_custom_call.1']
    #allocation4 [shape = 's32[1]{0}', space=sflag, size = 0x4, scoped, tag = 'scoped memory for tpu_custom_call.1']
    #allocation5 [shape = 'u8[1024]{0}', space=vmem, size = 0x400, scoped, tag = 'output window, operand 0, single buffered']
    %11 = vsyncpa [#allocation3], 0
    %12 = vsyncpa [#allocation4], 0
    // Predicated region
    $region2: #{tpu_custom_call.1} parent=1 // pred_check
      _
    $region3: #{tpu_custom_call.1} parent=1 // pred_check_branch
      %14 = sbr.rel (0) target = $region5
    $region4: #{tpu_custom_call.1} parent=1 // pred_region
      _
    $region5: #{tpu_custom_call.1} parent=1 // pred_fallthru
      _
    // Predicated region
    $region6: #{tpu_custom_call.1} parent=1 // pred_check
      _
    $region7: #{tpu_custom_call.1} parent=1 // pred_check_branch
      %16 = sbr.rel (0) target = $region9
    $region8: #{tpu_custom_call.1} parent=1 // pred_region
      _
    $region9: #{tpu_custom_call.1} parent=1 // pred_fallthru
      _
    // Predicated region
    $region10: #{tpu_custom_call.1} parent=1 // pred_check
      _
    $region11: #{tpu_custom_call.1} parent=1 // pred_check_branch
      %18 = sbr.rel (0) target = $region13
    $region12: #{tpu_custom_call.1} parent=1 // pred_region
      %s20 = ssub.s32 15360, 15360
      %21 = vsyncadd [#allocation3], %s20
      %s22 = sshll.u32 [#allocation2], 4
      %s23 = int_to_ptr.vmem [resolvable:$true] %s22
      %28 = dma.hbm_to_vmem [thread:$0]  %s2, 15360, %s23, [#allocation3], 384, 384, 24
    $region13: #{tpu_custom_call.1} parent=1 // pred_fallthru
      _
    // Predicated region
    $region14: #{tpu_custom_call.1} parent=1 // pred_check
      _
    $region15: #{tpu_custom_call.1} parent=1 // pred_check_branch
      %30 = sbr.rel (0) target = $region17
    $region16: #{tpu_custom_call.1} parent=1 // pred_region
      _
    $region17: #{tpu_custom_call.1} parent=1 // pred_fallthru
      _
    // Predicated region
    $region18: #{tpu_custom_call.1} parent=1 // pred_check
      _
    $region19: #{tpu_custom_call.1} parent=1 // pred_check_branch
      %32 = sbr.rel (0) target = $region21
    $region20: #{tpu_custom_call.1} parent=1 // pred_region
      _
    $region21: #{tpu_custom_call.1} parent=1 // pred_fallthru
      _
    // Predicated region
    $region22: #{tpu_custom_call.1} parent=1 // pred_check
      _
    $region23: #{tpu_custom_call.1} parent=1 // pred_check_branch
      %34 = sbr.rel (0) target = $region25
    $region24: #{tpu_custom_call.1} parent=1 // pred_region
      _
    $region25: #{tpu_custom_call.1} parent=1 // pred_fallthru
      _
    // Predicated region
    $region26: #{tpu_custom_call.1} parent=1 // pred_check
      _
    $region27: #{tpu_custom_call.1} parent=1 // pred_check_branch
      %36 = sbr.rel (0) target = $region29
    $region28: #{tpu_custom_call.1} parent=1 // pred_region
      %37 = dma.done [#allocation3], 15360
    $region29: #{tpu_custom_call.1} parent=1 // pred_fallthru
      _
    %v38 = vld [vmem:[%s0] sm:$0xff]
    %v39 = vld [vmem:[%s0 + $0x8] sm:$0xff]
    %v40 = vld [vmem:[%s1] sm:$0xff]
    %v41 = vld [vmem:[%s1 + $0x8] sm:$0xff]
    %v42 = vld [vmem:[%s1 + $0x10] sm:$0xff]
    %v43 = vld [vmem:[%s1 + $0x18] sm:$0xff]
    %v44 = vld [vmem:[%s1 + $0x20] sm:$0xff]
    %v45 = vld [vmem:[%s1 + $0x28] sm:$0xff]
    %v46 = vld [vmem:[%s1 + $0x30] sm:$0xff]
    %v47 = vld [vmem:[%s1 + $0x38] sm:$0xff]
    %v48 = vld [vmem:[%s1 + $0x40] sm:$0xff]
    %v49 = vld [vmem:[%s1 + $0x48] sm:$0xff]
    %v50 = vld [vmem:[%s1 + $0x50] sm:$0xff]
    %v51 = vld [vmem:[%s1 + $0x58] sm:$0xff]
    %v52 = vld [vmem:[%s3] sm:$0x7]
    %v54 = vlaneseq
    %v55 = vshrl.u32 %v54, 7
    %v56 = vsub.s32 0, %v55
    %v57 = vrot.slane %v52, %v56
    %v58 = vlaneseq
    %v59 = vshrl.u32 %v58, 7
    %v60 = vsub.s32 1, %v59
    %v61 = vrot.slane %v52, %v60
    %v62 = vlaneseq
    %v63 = vshrl.u32 %v62, 7
    %v64 = vsub.s32 2, %v63
    %v65 = vrot.slane %v52, %v64
    %vm69 = vcmask 261120
    %v71 = vsel %vm69, %v38, 0
    %v74 = vsel %vm69, %v39, 0
    %76 = vmatprep.subr.mxu0 0.0
    %77 = vmatpush1.msra.mxu0 0.0
    %78 = vmatprep.subr.mxu0 0.0
    %79 = vmatpush1.msra.mxu0 0.0
    %80 = vmatprep.subr.mxu0 0.0
    %81 = vmatpush1.msra.mxu0 0.0
    %82 = vmatprep.subr.mxu0 0.0
    %83 = vmatpush1.msra.mxu0 0.0
    %84 = vmatprep.subr.mxu0 0.0
    %85 = vmatpush1.msra.mxu0 0.0
    %86 = vmatprep.subr.mxu0 0.0
    %87 = vmatpush1.msra.mxu0 0.0
    %88 = vmatprep.subr.mxu0 0.0
    %89 = vmatpush1.msra.mxu0 0.0
    %90 = vmatprep.subr.mxu0 0.0
    %91 = vmatpush1.msra.mxu0 0.0
    %92 = vmatprep.subr.mxu0 0.0
    %93 = vmatpush1.msra.mxu0 0.0
    %94 = vmatprep.subr.mxu0 0.0
    %95 = vmatpush1.msra.mxu0 0.0
    %96 = vmatprep.subr.mxu0 0.0
    %97 = vmatpush1.msra.mxu0 0.0
    %98 = vmatprep.subr.mxu0 0.0
    %99 = vmatpush1.msra.mxu0 0.0
    %100 = vmatprep.subr.mxu0 %v50
    %101 = vmatpush1.msra.mxu0 %v49
    %102 = vmatprep.subr.mxu0 %v47
    %103 = vmatpush1.msra.mxu0 %v46
    %104 = vmatprep.subr.mxu0 %v44
    %105 = vmatpush1.msra.mxu0 %v43
    %106 = vmatprep.subr.mxu0 %v41
    %107 = vmatpush1.msra.mxu0 %v40
    %108 = vmatprep.subr.mxu0 0.0
    %109 = vmatpush2.msra.mxu0 0.0
    %110 = vmatprep.subr.mxu0 0.0
    %111 = vmatpush2.msra.mxu0 0.0
    %112 = vmatprep.subr.mxu0 0.0
    %113 = vmatpush2.msra.mxu0 0.0
    %114 = vmatprep.subr.mxu0 0.0
    %115 = vmatpush2.msra.mxu0 0.0
    %116 = vmatprep.subr.mxu0 0.0
    %117 = vmatpush2.msra.mxu0 0.0
    %118 = vmatprep.subr.mxu0 0.0
    %119 = vmatpush2.msra.mxu0 0.0
    %120 = vmatprep.subr.mxu0 0.0
    %121 = vmatpush2.msra.mxu0 0.0
    %122 = vmatprep.subr.mxu0 0.0
    %123 = vmatpush2.msra.mxu0 0.0
    %124 = vmatprep.subr.mxu0 0.0
    %125 = vmatpush2.msra.mxu0 0.0
    %126 = vmatprep.subr.mxu0 0.0
    %127 = vmatpush2.msra.mxu0 0.0
    %128 = vmatprep.subr.mxu0 0.0
    %129 = vmatpush2.msra.mxu0 0.0
    %130 = vmatprep.subr.mxu0 0.0
    %131 = vmatpush2.msra.mxu0 0.0
    %132 = vmatprep.subr.mxu0 0.0
    %133 = vmatpush2.msra.mxu0 0.0
    %134 = vmatprep.subr.mxu0 0.0
    %135 = vmatpush2.msra.mxu0 0.0
    %136 = vmatprep.subr.mxu0 0.0
    %137 = vmatpush2.msra.mxu0 0.0
    %138 = vmatprep.subr.mxu0 0.0
    %139 = vmatpush2.msra.mxu0 0.0
    %140 = vmatprep.mubr.f32.mxu0 0.0
    %141 = vmatmul.mubr.f32.gmra.mxu0 %v71
    %v142 = vpop.f32.mrf.mxu0
    %v143 = vadd.f32 %v57, %v142
    %v144 = vpop.f32.mrf.mxu0
    %v145 = vadd.f32 %v61, %v144
    %146 = vmatprep.mubr.f32.mxu0 0.0
    %147 = vmatmul.mubr.f32.gmra.mxu0 %v74
    %v148 = vpop.f32.mrf.mxu0
    %v149 = vadd.f32 %v57, %v148
    %v150 = vpop.f32.mrf.mxu0
    %v151 = vadd.f32 %v61, %v150
    %152 = vdwg.mxu0
    %153 = vmatprep.subr.mxu0 0.0
    %154 = vmatpush1.msra.mxu0 0.0
    %155 = vmatprep.subr.mxu0 0.0
    %156 = vmatpush1.msra.mxu0 0.0
    %157 = vmatprep.subr.mxu0 0.0
    %158 = vmatpush1.msra.mxu0 0.0
    %159 = vmatprep.subr.mxu0 0.0
    %160 = vmatpush1.msra.mxu0 0.0
    %161 = vmatprep.subr.mxu0 0.0
    %162 = vmatpush1.msra.mxu0 0.0
    %163 = vmatprep.subr.mxu0 0.0
    %164 = vmatpush1.msra.mxu0 0.0
    %165 = vmatprep.subr.mxu0 0.0
    %166 = vmatpush1.msra.mxu0 0.0
    %167 = vmatprep.subr.mxu0 0.0
    %168 = vmatpush1.msra.mxu0 0.0
    %169 = vmatprep.subr.mxu0 0.0
    %170 = vmatpush1.msra.mxu0 0.0
    %171 = vmatprep.subr.mxu0 0.0
    %172 = vmatpush1.msra.mxu0 0.0
    %173 = vmatprep.subr.mxu0 0.0
    %174 = vmatpush1.msra.mxu0 0.0
    %175 = vmatprep.subr.mxu0 0.0
    %176 = vmatpush1.msra.mxu0 0.0
    %177 = vmatprep.subr.mxu0 0.0
    %178 = vmatpush1.msra.mxu0 %v51
    %179 = vmatprep.subr.mxu0 0.0
    %180 = vmatpush1.msra.mxu0 %v48
    %181 = vmatprep.subr.mxu0 0.0
    %182 = vmatpush1.msra.mxu0 %v45
    %183 = vmatprep.subr.mxu0 0.0
    %184 = vmatpush1.msra.mxu0 %v42
    %185 = vmatprep.subr.mxu0 0.0
    %186 = vmatpush2.msra.mxu0 0.0
    %187 = vmatprep.subr.mxu0 0.0
    %188 = vmatpush2.msra.mxu0 0.0
    %189 = vmatprep.subr.mxu0 0.0
    %190 = vmatpush2.msra.mxu0 0.0
    %191 = vmatprep.subr.mxu0 0.0
    %192 = vmatpush2.msra.mxu0 0.0
    %193 = vmatprep.subr.mxu0 0.0
    %194 = vmatpush2.msra.mxu0 0.0
    %195 = vmatprep.subr.mxu0 0.0
    %196 = vmatpush2.msra.mxu0 0.0
    %197 = vmatprep.subr.mxu0 0.0
    %198 = vmatpush2.msra.mxu0 0.0
    %199 = vmatprep.subr.mxu0 0.0
    %200 = vmatpush2.msra.mxu0 0.0
    %201 = vmatprep.subr.mxu0 0.0
    %202 = vmatpush2.msra.mxu0 0.0
    %203 = vmatprep.subr.mxu0 0.0
    %204 = vmatpush2.msra.mxu0 0.0
    %205 = vmatprep.subr.mxu0 0.0
    %206 = vmatpush2.msra.mxu0 0.0
    %207 = vmatprep.subr.mxu0 0.0
    %208 = vmatpush2.msra.mxu0 0.0
    %209 = vmatprep.subr.mxu0 0.0
    %210 = vmatpush2.msra.mxu0 0.0
    %211 = vmatprep.subr.mxu0 0.0
    %212 = vmatpush2.msra.mxu0 0.0
    %213 = vmatprep.subr.mxu0 0.0
    %214 = vmatpush2.msra.mxu0 0.0
    %215 = vmatprep.subr.mxu0 0.0
    %216 = vmatpush2.msra.mxu0 0.0
    %217 = vmatprep.mubr.f32.mxu0 0.0
    %218 = vmatmul.mubr.f32.gmra.mxu0 %v71
    %v219 = vpop.f32.mrf.mxu0
    %v220 = vadd.f32 %v65, %v219
    %v221 = vpop.f32.mrf.mxu0
    %222 = vmatprep.mubr.f32.mxu0 0.0
    %223 = vmatmul.mubr.f32.gmra.mxu0 %v74
    %v224 = vpop.f32.mrf.mxu0
    %v225 = vadd.f32 %v65, %v224
    %v226 = vpop.f32.mrf.mxu0
    %227 = vdwg.mxu0
    %v228 = vld [vmem:[#allocation2] sm:$0xff]
    %v229 = vld [vmem:[#allocation2 + $0x8] sm:$0xff]
    %v230 = vld [vmem:[#allocation2 + $0x10] sm:$0xff]
    %v231 = vld [vmem:[#allocation2 + $0x18] sm:$0xff]
    %v232 = vld [vmem:[#allocation2 + $0x20] sm:$0xff]
    %v233 = vld [vmem:[#allocation2 + $0x28] sm:$0xff]
    %v234 = vld [vmem:[#allocation2 + $0x30] sm:$0xff]
    %v235 = vld [vmem:[#allocation2 + $0x38] sm:$0xff]
    %v236 = vld [vmem:[#allocation2 + $0x40] sm:$0xff]
    %v237 = vld [vmem:[#allocation2 + $0x48] sm:$0xff]
    %v238 = vld [vmem:[#allocation2 + $0x50] sm:$0xff]
    %v239 = vld [vmem:[#allocation2 + $0x58] sm:$0xff]
    %v240 = vld [vmem:[#allocation2 + $0x60] sm:$0xff]
    %v241 = vld [vmem:[#allocation2 + $0x68] sm:$0xff]
    %v242 = vld [vmem:[#allocation2 + $0x70] sm:$0xff]
    %v243 = vld [vmem:[#allocation2 + $0x78] sm:$0xff]
    %v244 = vld [vmem:[#allocation2 + $0x80] sm:$0xff]
    %v245 = vld [vmem:[#allocation2 + $0x88] sm:$0xff]
    %v246 = vld [vmem:[#allocation2 + $0x90] sm:$0xff]
    %v247 = vld [vmem:[#allocation2 + $0x98] sm:$0xff]
    %v248 = vld [vmem:[#allocation2 + $0xa0] sm:$0xff]
    %v249 = vld [vmem:[#allocation2 + $0xa8] sm:$0xff]
    %v250 = vld [vmem:[#allocation2 + $0xb0] sm:$0xff]
    %v251 = vld [vmem:[#allocation2 + $0xb8] sm:$0xff]
    %v252 = vld [vmem:[#allocation2 + $0xc0] sm:$0xff]
    %v253 = vld [vmem:[#allocation2 + $0xc8] sm:$0xff]
    %v254 = vld [vmem:[#allocation2 + $0xd0] sm:$0xff]
    %v255 = vld [vmem:[#allocation2 + $0xd8] sm:$0xff]
    %v256 = vld [vmem:[#allocation2 + $0xe0] sm:$0xff]
    %v257 = vld [vmem:[#allocation2 + $0xe8] sm:$0xff]
    %v258 = vld [vmem:[#allocation2 + $0xf0] sm:$0xff]
    %v259 = vld [vmem:[#allocation2 + $0xf8] sm:$0xff]
    %v260 = vld [vmem:[#allocation2 + $0x100] sm:$0xff]
    %v261 = vld [vmem:[#allocation2 + $0x108] sm:$0xff]
    %v262 = vld [vmem:[#allocation2 + $0x110] sm:$0xff]
    %v263 = vld [vmem:[#allocation2 + $0x118] sm:$0xff]
    %v264 = vld [vmem:[#allocation2 + $0x120] sm:$0xff]
    %v265 = vld [vmem:[#allocation2 + $0x128] sm:$0xff]
    %v266 = vld [vmem:[#allocation2 + $0x130] sm:$0xff]
    %v267 = vld [vmem:[#allocation2 + $0x138] sm:$0xff]
    %v268 = vld [vmem:[#allocation2 + $0x140] sm:$0xff]
    %v269 = vld [vmem:[#allocation2 + $0x148] sm:$0xff]
    %v270 = vld [vmem:[#allocation2 + $0x150] sm:$0xff]
    %v271 = vld [vmem:[#allocation2 + $0x158] sm:$0xff]
    %v272 = vld [vmem:[#allocation2 + $0x160] sm:$0xff]
    %v273 = vld [vmem:[#allocation2 + $0x168] sm:$0xff]
    %v274 = vld [vmem:[#allocation2 + $0x170] sm:$0xff]
    %v275 = vld [vmem:[#allocation2 + $0x178] sm:$0xff]
    %v276 = vld [vmem:[#allocation2 + $0x180] sm:$0xff]
    %v277 = vld [vmem:[#allocation2 + $0x188] sm:$0xff]
    %v278 = vld [vmem:[#allocation2 + $0x190] sm:$0xff]
    %v279 = vld [vmem:[#allocation2 + $0x198] sm:$0xff]
    %v280 = vld [vmem:[#allocation2 + $0x1a0] sm:$0xff]
    %v281 = vld [vmem:[#allocation2 + $0x1a8] sm:$0xff]
    %v282 = vld [vmem:[#allocation2 + $0x1b0] sm:$0xff]
    %v283 = vld [vmem:[#allocation2 + $0x1b8] sm:$0xff]
    %v284 = vld [vmem:[#allocation2 + $0x1c0] sm:$0xff]
    %v285 = vld [vmem:[#allocation2 + $0x1c8] sm:$0xff]
    %v286 = vld [vmem:[#allocation2 + $0x1d0] sm:$0xff]
    %v287 = vld [vmem:[#allocation2 + $0x1d8] sm:$0xff]
    %v288 = vld [vmem:[#allocation2 + $0x1e0] sm:$0xff]
    %v289 = vld [vmem:[#allocation2 + $0x1e8] sm:$0xff]
    %v290 = vld [vmem:[#allocation2 + $0x1f0] sm:$0xff]
    %v291 = vld [vmem:[#allocation2 + $0x1f8] sm:$0xff]
    %v292 = vld [vmem:[#allocation2 + $0x200] sm:$0xff]
    %v293 = vld [vmem:[#allocation2 + $0x208] sm:$0xff]
    %v294 = vld [vmem:[#allocation2 + $0x210] sm:$0xff]
    %v295 = vld [vmem:[#allocation2 + $0x218] sm:$0xff]
    %v296 = vld [vmem:[#allocation2 + $0x220] sm:$0xff]
    %v297 = vld [vmem:[#allocation2 + $0x228] sm:$0xff]
    %v298 = vld [vmem:[#allocation2 + $0x230] sm:$0xff]
    %v299 = vld [vmem:[#allocation2 + $0x238] sm:$0xff]
    %v300 = vld [vmem:[#allocation2 + $0x240] sm:$0xff]
    %v301 = vld [vmem:[#allocation2 + $0x248] sm:$0xff]
    %v302 = vld [vmem:[#allocation2 + $0x250] sm:$0xff]
    %v303 = vld [vmem:[#allocation2 + $0x258] sm:$0xff]
    %v304 = vld [vmem:[#allocation2 + $0x260] sm:$0xff]
    %v305 = vld [vmem:[#allocation2 + $0x268] sm:$0xff]
    %v306 = vld [vmem:[#allocation2 + $0x270] sm:$0xff]
    %v307 = vld [vmem:[#allocation2 + $0x278] sm:$0xff]
    %v308 = vld [vmem:[#allocation2 + $0x280] sm:$0xff]
    %v309 = vld [vmem:[#allocation2 + $0x288] sm:$0xff]
    %v310 = vld [vmem:[#allocation2 + $0x290] sm:$0xff]
    %v311 = vld [vmem:[#allocation2 + $0x298] sm:$0xff]
    %v312 = vld [vmem:[#allocation2 + $0x2a0] sm:$0xff]
    %v313 = vld [vmem:[#allocation2 + $0x2a8] sm:$0xff]
    %v314 = vld [vmem:[#allocation2 + $0x2b0] sm:$0xff]
    %v315 = vld [vmem:[#allocation2 + $0x2b8] sm:$0xff]
    %v316 = vld [vmem:[#allocation2 + $0x2c0] sm:$0xff]
    %v317 = vld [vmem:[#allocation2 + $0x2c8] sm:$0xff]
    %v318 = vld [vmem:[#allocation2 + $0x2d0] sm:$0xff]
    %v319 = vld [vmem:[#allocation2 + $0x2d8] sm:$0xff]
    %v320 = vld [vmem:[#allocation2 + $0x2e0] sm:$0xff]
    %v321 = vld [vmem:[#allocation2 + $0x2e8] sm:$0xff]
    %v322 = vld [vmem:[#allocation2 + $0x2f0] sm:$0xff]
    %v323 = vld [vmem:[#allocation2 + $0x2f8] sm:$0xff]
    %v324 = vld [vmem:[#allocation2 + $0x300] sm:$0xff]
    %v325 = vld [vmem:[#allocation2 + $0x308] sm:$0xff]
    %v326 = vld [vmem:[#allocation2 + $0x310] sm:$0xff]
    %v327 = vld [vmem:[#allocation2 + $0x318] sm:$0xff]
    %v328 = vld [vmem:[#allocation2 + $0x320] sm:$0xff]
    %v329 = vld [vmem:[#allocation2 + $0x328] sm:$0xff]
    %v330 = vld [vmem:[#allocation2 + $0x330] sm:$0xff]
    %v331 = vld [vmem:[#allocation2 + $0x338] sm:$0xff]
    %v332 = vld [vmem:[#allocation2 + $0x340] sm:$0xff]
    %v333 = vld [vmem:[#allocation2 + $0x348] sm:$0xff]
    %v334 = vld [vmem:[#allocation2 + $0x350] sm:$0xff]
    %v335 = vld [vmem:[#allocation2 + $0x358] sm:$0xff]
    %v336 = vld [vmem:[#allocation2 + $0x360] sm:$0xff]
    %v337 = vld [vmem:[#allocation2 + $0x368] sm:$0xff]
    %v338 = vld [vmem:[#allocation2 + $0x370] sm:$0xff]
    %v339 = vld [vmem:[#allocation2 + $0x378] sm:$0xff]
    %v340 = vld [vmem:[#allocation2 + $0x380] sm:$0xff]
    %v341 = vld [vmem:[#allocation2 + $0x388] sm:$0xff]
    %v342 = vld [vmem:[#allocation2 + $0x390] sm:$0xff]
    %v343 = vld [vmem:[#allocation2 + $0x398] sm:$0xff]
    %v344 = vld [vmem:[#allocation2 + $0x3a0] sm:$0xff]
    %v345 = vld [vmem:[#allocation2 + $0x3a8] sm:$0xff]
    %v346 = vld [vmem:[#allocation2 + $0x3b0] sm:$0xff]
    %v347 = vld [vmem:[#allocation2 + $0x3b8] sm:$0xff]
    %vm348 = vcmask 523264
    %v350 = vsel %vm348, 0.0, 0
    %352 = vmatprep.subr.mxu0 %v274
    %353 = vmatpush1.msra.mxu0 %v273
    %354 = vmatprep.subr.mxu0 %v271
    %355 = vmatpush1.msra.mxu0 %v270
    %356 = vmatprep.subr.mxu0 %v268
    %357 = vmatpush1.msra.mxu0 %v267
    %358 = vmatprep.subr.mxu0 %v265
    %359 = vmatpush1.msra.mxu0 %v264
    %360 = vmatprep.subr.mxu0 %v262
    %361 = vmatpush1.msra.mxu0 %v261
    %362 = vmatprep.subr.mxu0 %v259
    %363 = vmatpush1.msra.mxu0 %v258
    %364 = vmatprep.subr.mxu0 %v256
    %365 = vmatpush1.msra.mxu0 %v255
    %366 = vmatprep.subr.mxu0 %v253
    %367 = vmatpush1.msra.mxu0 %v252
    %368 = vmatprep.subr.mxu0 %v250
    %369 = vmatpush1.msra.mxu0 %v249
    %370 = vmatprep.subr.mxu0 %v247
    %371 = vmatpush1.msra.mxu0 %v246
    %372 = vmatprep.subr.mxu0 %v244
    %373 = vmatpush1.msra.mxu0 %v243
    %374 = vmatprep.subr.mxu0 %v241
    %375 = vmatpush1.msra.mxu0 %v240
    %376 = vmatprep.subr.mxu0 %v238
    %377 = vmatpush1.msra.mxu0 %v237
    %378 = vmatprep.subr.mxu0 %v235
    %379 = vmatpush1.msra.mxu0 %v234
    %380 = vmatprep.subr.mxu0 %v232
    %381 = vmatpush1.msra.mxu0 %v231
    %382 = vmatprep.subr.mxu0 %v229
    %383 = vmatpush1.msra.mxu0 %v228
    %384 = vmatprep.subr.mxu0 %v322
    %385 = vmatpush2.msra.mxu0 %v321
    %386 = vmatprep.subr.mxu0 %v319
    %387 = vmatpush2.msra.mxu0 %v318
    %388 = vmatprep.subr.mxu0 %v316
    %389 = vmatpush2.msra.mxu0 %v315
    %390 = vmatprep.subr.mxu0 %v313
    %391 = vmatpush2.msra.mxu0 %v312
    %392 = vmatprep.subr.mxu0 %v310
    %393 = vmatpush2.msra.mxu0 %v309
    %394 = vmatprep.subr.mxu0 %v307
    %395 = vmatpush2.msra.mxu0 %v306
    %396 = vmatprep.subr.mxu0 %v304
    %397 = vmatpush2.msra.mxu0 %v303
    %398 = vmatprep.subr.mxu0 %v301
    %399 = vmatpush2.msra.mxu0 %v300
    %400 = vmatprep.subr.mxu0 %v298
    %401 = vmatpush2.msra.mxu0 %v297
    %402 = vmatprep.subr.mxu0 %v295
    %403 = vmatpush2.msra.mxu0 %v294
    %404 = vmatprep.subr.mxu0 %v292
    %405 = vmatpush2.msra.mxu0 %v291
    %406 = vmatprep.subr.mxu0 %v289
    %407 = vmatpush2.msra.mxu0 %v288
    %408 = vmatprep.subr.mxu0 %v286
    %409 = vmatpush2.msra.mxu0 %v285
    %410 = vmatprep.subr.mxu0 %v283
    %411 = vmatpush2.msra.mxu0 %v282
    %412 = vmatprep.subr.mxu0 %v280
    %413 = vmatpush2.msra.mxu0 %v279
    %414 = vmatprep.subr.mxu0 %v277
    %415 = vmatpush2.msra.mxu0 %v276
    %416 = vmatprep.mubr.f32.mxu0 0.0
    %417 = vmatmul.mubr.f32.gmra.mxu0 0.0
    %v418 = vpop.f32.mrf.mxu0
    %v419 = vadd.f32 0.0, %v418
    %v420 = vpop.f32.mrf.mxu0
    %v421 = vadd.f32 0.0, %v420
    %422 = vdwg.mxu0
    %423 = vmatprep.subr.mxu0 0.0
    %424 = vmatpush1.msra.mxu0 0.0
    %425 = vmatprep.subr.mxu0 0.0
    %426 = vmatpush1.msra.mxu0 0.0
    %427 = vmatprep.subr.mxu0 0.0
    %428 = vmatpush1.msra.mxu0 0.0
    %429 = vmatprep.subr.mxu0 0.0
    %430 = vmatpush1.msra.mxu0 0.0
    %431 = vmatprep.subr.mxu0 0.0
    %432 = vmatpush1.msra.mxu0 0.0
    %433 = vmatprep.subr.mxu0 0.0
    %434 = vmatpush1.msra.mxu0 0.0
    %435 = vmatprep.subr.mxu0 0.0
    %436 = vmatpush1.msra.mxu0 0.0
    %437 = vmatprep.subr.mxu0 0.0
    %438 = vmatpush1.msra.mxu0 0.0
    %439 = vmatprep.subr.mxu0 %v346
    %440 = vmatpush1.msra.mxu0 %v345
    %441 = vmatprep.subr.mxu0 %v343
    %442 = vmatpush1.msra.mxu0 %v342
    %443 = vmatprep.subr.mxu0 %v340
    %444 = vmatpush1.msra.mxu0 %v339
    %445 = vmatprep.subr.mxu0 %v337
    %446 = vmatpush1.msra.mxu0 %v336
    %447 = vmatprep.subr.mxu0 %v334
    %448 = vmatpush1.msra.mxu0 %v333
    %449 = vmatprep.subr.mxu0 %v331
    %450 = vmatpush1.msra.mxu0 %v330
    %451 = vmatprep.subr.mxu0 %v328
    %452 = vmatpush1.msra.mxu0 %v327
    %453 = vmatprep.subr.mxu0 %v325
    %454 = vmatpush1.msra.mxu0 %v324
    %455 = vmatprep.subr.mxu0 0.0
    %456 = vmatpush2.msra.mxu0 0.0
    %457 = vmatprep.subr.mxu0 0.0
    %458 = vmatpush2.msra.mxu0 0.0
    %459 = vmatprep.subr.mxu0 0.0
    %460 = vmatpush2.msra.mxu0 0.0
    %461 = vmatprep.subr.mxu0 0.0
    %462 = vmatpush2.msra.mxu0 0.0
    %463 = vmatprep.subr.mxu0 0.0
    %464 = vmatpush2.msra.mxu0 0.0
    %465 = vmatprep.subr.mxu0 0.0
    %466 = vmatpush2.msra.mxu0 0.0
    %467 = vmatprep.subr.mxu0 0.0
    %468 = vmatpush2.msra.mxu0 0.0
    %469 = vmatprep.subr.mxu0 0.0
    %470 = vmatpush2.msra.mxu0 0.0
    %471 = vmatprep.subr.mxu0 0.0
    %472 = vmatpush2.msra.mxu0 0.0
    %473 = vmatprep.subr.mxu0 0.0
    %474 = vmatpush2.msra.mxu0 0.0
    %475 = vmatprep.subr.mxu0 0.0
    %476 = vmatpush2.msra.mxu0 0.0
    %477 = vmatprep.subr.mxu0 0.0
    %478 = vmatpush2.msra.mxu0 0.0
    %479 = vmatprep.subr.mxu0 0.0
    %480 = vmatpush2.msra.mxu0 0.0
    %481 = vmatprep.subr.mxu0 0.0
    %482 = vmatpush2.msra.mxu0 0.0
    %483 = vmatprep.subr.mxu0 0.0
    %484 = vmatpush2.msra.mxu0 0.0
    %485 = vmatprep.subr.mxu0 0.0
    %486 = vmatpush2.msra.mxu0 0.0
    %487 = vmatprep.mubr.f32.mxu0 0.0
    %488 = vmatmul.mubr.f32.gmra.mxu0 %v350
    %v489 = vpop.f32.mrf.mxu0
    %v490 = vadd.f32 %v419, %v489
    %v491 = vpop.f32.mrf.mxu0
    %v492 = vadd.f32 %v421, %v491
    %493 = vdwg.mxu0
    %494 = vmatprep.subr.mxu0 0.0
    %495 = vmatpush1.msra.mxu0 %v275
    %496 = vmatprep.subr.mxu0 0.0
    %497 = vmatpush1.msra.mxu0 %v272
    %498 = vmatprep.subr.mxu0 0.0
    %499 = vmatpush1.msra.mxu0 %v269
    %500 = vmatprep.subr.mxu0 0.0
    %501 = vmatpush1.msra.mxu0 %v266
    %502 = vmatprep.subr.mxu0 0.0
    %503 = vmatpush1.msra.mxu0 %v263
    %504 = vmatprep.subr.mxu0 0.0
    %505 = vmatpush1.msra.mxu0 %v260
    %506 = vmatprep.subr.mxu0 0.0
    %507 = vmatpush1.msra.mxu0 %v257
    %508 = vmatprep.subr.mxu0 0.0
    %509 = vmatpush1.msra.mxu0 %v254
    %510 = vmatprep.subr.mxu0 0.0
    %511 = vmatpush1.msra.mxu0 %v251
    %512 = vmatprep.subr.mxu0 0.0
    %513 = vmatpush1.msra.mxu0 %v248
    %514 = vmatprep.subr.mxu0 0.0
    %515 = vmatpush1.msra.mxu0 %v245
    %516 = vmatprep.subr.mxu0 0.0
    %517 = vmatpush1.msra.mxu0 %v242
    %518 = vmatprep.subr.mxu0 0.0
    %519 = vmatpush1.msra.mxu0 %v239
    %520 = vmatprep.subr.mxu0 0.0
    %521 = vmatpush1.msra.mxu0 %v236
    %522 = vmatprep.subr.mxu0 0.0
    %523 = vmatpush1.msra.mxu0 %v233
    %524 = vmatprep.subr.mxu0 0.0
    %525 = vmatpush1.msra.mxu0 %v230
    %526 = vmatprep.subr.mxu0 0.0
    %527 = vmatpush2.msra.mxu0 %v323
    %528 = vmatprep.subr.mxu0 0.0
    %529 = vmatpush2.msra.mxu0 %v320
    %530 = vmatprep.subr.mxu0 0.0
    %531 = vmatpush2.msra.mxu0 %v317
    %532 = vmatprep.subr.mxu0 0.0
    %533 = vmatpush2.msra.mxu0 %v314
    %534 = vmatprep.subr.mxu0 0.0
    %535 = vmatpush2.msra.mxu0 %v311
    %536 = vmatprep.subr.mxu0 0.0
    %537 = vmatpush2.msra.mxu0 %v308
    %538 = vmatprep.subr.mxu0 0.0
    %539 = vmatpush2.msra.mxu0 %v305
    %540 = vmatprep.subr.mxu0 0.0
    %541 = vmatpush2.msra.mxu0 %v302
    %542 = vmatprep.subr.mxu0 0.0
    %543 = vmatpush2.msra.mxu0 %v299
    %544 = vmatprep.subr.mxu0 0.0
    %545 = vmatpush2.msra.mxu0 %v296
    %546 = vmatprep.subr.mxu0 0.0
    %547 = vmatpush2.msra.mxu0 %v293
    %548 = vmatprep.subr.mxu0 0.0
    %549 = vmatpush2.msra.mxu0 %v290
    %550 = vmatprep.subr.mxu0 0.0
    %551 = vmatpush2.msra.mxu0 %v287
    %552 = vmatprep.subr.mxu0 0.0
    %553 = vmatpush2.msra.mxu0 %v284
    %554 = vmatprep.subr.mxu0 0.0
    %555 = vmatpush2.msra.mxu0 %v281
    %556 = vmatprep.subr.mxu0 0.0
    %557 = vmatpush2.msra.mxu0 %v278
    %558 = vmatprep.mubr.f32.mxu0 0.0
    %559 = vmatmul.mubr.f32.gmra.mxu0 0.0
    %v560 = vpop.f32.mrf.mxu0
    %v561 = vadd.f32 0.0, %v560
    %v562 = vpop.f32.mrf.mxu0
    %563 = vdwg.mxu0
    %564 = vmatprep.subr.mxu0 0.0
    %565 = vmatpush1.msra.mxu0 0.0
    %566 = vmatprep.subr.mxu0 0.0
    %567 = vmatpush1.msra.mxu0 0.0
    %568 = vmatprep.subr.mxu0 0.0
    %569 = vmatpush1.msra.mxu0 0.0
    %570 = vmatprep.subr.mxu0 0.0
    %571 = vmatpush1.msra.mxu0 0.0
    %572 = vmatprep.subr.mxu0 0.0
    %573 = vmatpush1.msra.mxu0 0.0
    %574 = vmatprep.subr.mxu0 0.0
    %575 = vmatpush1.msra.mxu0 0.0
    %576 = vmatprep.subr.mxu0 0.0
    %577 = vmatpush1.msra.mxu0 0.0
    %578 = vmatprep.subr.mxu0 0.0
    %579 = vmatpush1.msra.mxu0 0.0
    %580 = vmatprep.subr.mxu0 0.0
    %581 = vmatpush1.msra.mxu0 %v347
    %582 = vmatprep.subr.mxu0 0.0
    %583 = vmatpush1.msra.mxu0 %v344
    %584 = vmatprep.subr.mxu0 0.0
    %585 = vmatpush1.msra.mxu0 %v341
    %586 = vmatprep.subr.mxu0 0.0
    %587 = vmatpush1.msra.mxu0 %v338
    %588 = vmatprep.subr.mxu0 0.0
    %589 = vmatpush1.msra.mxu0 %v335
    %590 = vmatprep.subr.mxu0 0.0
    %591 = vmatpush1.msra.mxu0 %v332
    %592 = vmatprep.subr.mxu0 0.0
    %593 = vmatpush1.msra.mxu0 %v329
    %594 = vmatprep.subr.mxu0 0.0
    %595 = vmatpush1.msra.mxu0 %v326
    %596 = vmatprep.subr.mxu0 0.0
    %597 = vmatpush2.msra.mxu0 0.0
    %598 = vmatprep.subr.mxu0 0.0
    %599 = vmatpush2.msra.mxu0 0.0
    %600 = vmatprep.subr.mxu0 0.0
    %601 = vmatpush2.msra.mxu0 0.0
    %602 = vmatprep.subr.mxu0 0.0
    %603 = vmatpush2.msra.mxu0 0.0
    %604 = vmatprep.subr.mxu0 0.0
    %605 = vmatpush2.msra.mxu0 0.0
    %606 = vmatprep.subr.mxu0 0.0
    %607 = vmatpush2.msra.mxu0 0.0
    %608 = vmatprep.subr.mxu0 0.0
    %609 = vmatpush2.msra.mxu0 0.0
    %610 = vmatprep.subr.mxu0 0.0
    %611 = vmatpush2.msra.mxu0 0.0
    %612 = vmatprep.subr.mxu0 0.0
    %613 = vmatpush2.msra.mxu0 0.0
    %614 = vmatprep.subr.mxu0 0.0
    %615 = vmatpush2.msra.mxu0 0.0
    %616 = vmatprep.subr.mxu0 0.0
    %617 = vmatpush2.msra.mxu0 0.0
    %618 = vmatprep.subr.mxu0 0.0
    %619 = vmatpush2.msra.mxu0 0.0
    %620 = vmatprep.subr.mxu0 0.0
    %621 = vmatpush2.msra.mxu0 0.0
    %622 = vmatprep.subr.mxu0 0.0
    %623 = vmatpush2.msra.mxu0 0.0
    %624 = vmatprep.subr.mxu0 0.0
    %625 = vmatpush2.msra.mxu0 0.0
    %626 = vmatprep.subr.mxu0 0.0
    %627 = vmatpush2.msra.mxu0 0.0
    %628 = vmatprep.mubr.f32.mxu0 0.0
    %629 = vmatmul.mubr.f32.gmra.mxu0 %v350
    %v630 = vpop.f32.mrf.mxu0
    %v631 = vadd.f32 %v561, %v630
    %v632 = vpop.f32.mrf.mxu0
    %633 = vdwg.mxu0
    %v634 = vadd.f32 %v143, %v490
    %v635 = vadd.f32 %v145, %v492
    %v636 = vadd.f32 %v220, %v631
    %v637 = vtanh.pop %v634
    %v638 = vtanh.pop %v635
    %v639 = vtanh.pop %v636
    %v641 = vsel %vm348, %v639, 0
    %643 = vmatprep.subr.mxu0 %v274
    %644 = vmatpush1.msra.mxu0 %v273
    %645 = vmatprep.subr.mxu0 %v271
    %646 = vmatpush1.msra.mxu0 %v270
    %647 = vmatprep.subr.mxu0 %v268
    %648 = vmatpush1.msra.mxu0 %v267
    %649 = vmatprep.subr.mxu0 %v265
    %650 = vmatpush1.msra.mxu0 %v264
    %651 = vmatprep.subr.mxu0 %v262
    %652 = vmatpush1.msra.mxu0 %v261
    %653 = vmatprep.subr.mxu0 %v259
    %654 = vmatpush1.msra.mxu0 %v258
    %655 = vmatprep.subr.mxu0 %v256
    %656 = vmatpush1.msra.mxu0 %v255
    %657 = vmatprep.subr.mxu0 %v253
    %658 = vmatpush1.msra.mxu0 %v252
    %659 = vmatprep.subr.mxu0 %v250
    %660 = vmatpush1.msra.mxu0 %v249
    %661 = vmatprep.subr.mxu0 %v247
    %662 = vmatpush1.msra.mxu0 %v246
    %663 = vmatprep.subr.mxu0 %v244
    %664 = vmatpush1.msra.mxu0 %v243
    %665 = vmatprep.subr.mxu0 %v241
    %666 = vmatpush1.msra.mxu0 %v240
    %667 = vmatprep.subr.mxu0 %v238
    %668 = vmatpush1.msra.mxu0 %v237
    %669 = vmatprep.subr.mxu0 %v235
    %670 = vmatpush1.msra.mxu0 %v234
    %671 = vmatprep.subr.mxu0 %v232
    %672 = vmatpush1.msra.mxu0 %v231
    %673 = vmatprep.subr.mxu0 %v229
    %674 = vmatpush1.msra.mxu0 %v228
    %675 = vmatprep.subr.mxu0 %v322
    %676 = vmatpush2.msra.mxu0 %v321
    %677 = vmatprep.subr.mxu0 %v319
    %678 = vmatpush2.msra.mxu0 %v318
    %679 = vmatprep.subr.mxu0 %v316
    %680 = vmatpush2.msra.mxu0 %v315
    %681 = vmatprep.subr.mxu0 %v313
    %682 = vmatpush2.msra.mxu0 %v312
    %683 = vmatprep.subr.mxu0 %v310
    %684 = vmatpush2.msra.mxu0 %v309
    %685 = vmatprep.subr.mxu0 %v307
    %686 = vmatpush2.msra.mxu0 %v306
    %687 = vmatprep.subr.mxu0 %v304
    %688 = vmatpush2.msra.mxu0 %v303
    %689 = vmatprep.subr.mxu0 %v301
    %690 = vmatpush2.msra.mxu0 %v300
    %691 = vmatprep.subr.mxu0 %v298
    %692 = vmatpush2.msra.mxu0 %v297
    %693 = vmatprep.subr.mxu0 %v295
    %694 = vmatpush2.msra.mxu0 %v294
    %695 = vmatprep.subr.mxu0 %v292
    %696 = vmatpush2.msra.mxu0 %v291
    %697 = vmatprep.subr.mxu0 %v289
    %698 = vmatpush2.msra.mxu0 %v288
    %699 = vmatprep.subr.mxu0 %v286
    %700 = vmatpush2.msra.mxu0 %v285
    %701 = vmatprep.subr.mxu0 %v283
    %702 = vmatpush2.msra.mxu0 %v282
    %703 = vmatprep.subr.mxu0 %v280
    %704 = vmatpush2.msra.mxu0 %v279
    %705 = vmatprep.subr.mxu0 %v277
    %706 = vmatpush2.msra.mxu0 %v276
    %707 = vmatprep.mubr.f32.mxu0 %v638
    %708 = vmatmul.mubr.f32.gmra.mxu0 %v637
    %v709 = vpop.f32.mrf.mxu0
    %v710 = vadd.f32 0.0, %v709
    %v711 = vpop.f32.mrf.mxu0
    %v712 = vadd.f32 0.0, %v711
    %713 = vdwg.mxu0
    %714 = vmatprep.subr.mxu0 0.0
    %715 = vmatpush1.msra.mxu0 0.0
    %716 = vmatprep.subr.mxu0 0.0
    %717 = vmatpush1.msra.mxu0 0.0
    %718 = vmatprep.subr.mxu0 0.0
    %719 = vmatpush1.msra.mxu0 0.0
    %720 = vmatprep.subr.mxu0 0.0
    %721 = vmatpush1.msra.mxu0 0.0
    %722 = vmatprep.subr.mxu0 0.0
    %723 = vmatpush1.msra.mxu0 0.0
    %724 = vmatprep.subr.mxu0 0.0
    %725 = vmatpush1.msra.mxu0 0.0
    %726 = vmatprep.subr.mxu0 0.0
    %727 = vmatpush1.msra.mxu0 0.0
    %728 = vmatprep.subr.mxu0 0.0
    %729 = vmatpush1.msra.mxu0 0.0
    %730 = vmatprep.subr.mxu0 %v346
    %731 = vmatpush1.msra.mxu0 %v345
    %732 = vmatprep.subr.mxu0 %v343
    %733 = vmatpush1.msra.mxu0 %v342
    %734 = vmatprep.subr.mxu0 %v340
    %735 = vmatpush1.msra.mxu0 %v339
    %736 = vmatprep.subr.mxu0 %v337
    %737 = vmatpush1.msra.mxu0 %v336
    %738 = vmatprep.subr.mxu0 %v334
    %739 = vmatpush1.msra.mxu0 %v333
    %740 = vmatprep.subr.mxu0 %v331
    %741 = vmatpush1.msra.mxu0 %v330
    %742 = vmatprep.subr.mxu0 %v328
    %743 = vmatpush1.msra.mxu0 %v327
    %744 = vmatprep.subr.mxu0 %v325
    %745 = vmatpush1.msra.mxu0 %v324
    %746 = vmatprep.subr.mxu0 0.0
    %747 = vmatpush2.msra.mxu0 0.0
    %748 = vmatprep.subr.mxu0 0.0
    %749 = vmatpush2.msra.mxu0 0.0
    %750 = vmatprep.subr.mxu0 0.0
    %751 = vmatpush2.msra.mxu0 0.0
    %752 = vmatprep.subr.mxu0 0.0
    %753 = vmatpush2.msra.mxu0 0.0
    %754 = vmatprep.subr.mxu0 0.0
    %755 = vmatpush2.msra.mxu0 0.0
    %756 = vmatprep.subr.mxu0 0.0
    %757 = vmatpush2.msra.mxu0 0.0
    %758 = vmatprep.subr.mxu0 0.0
    %759 = vmatpush2.msra.mxu0 0.0
    %760 = vmatprep.subr.mxu0 0.0
    %761 = vmatpush2.msra.mxu0 0.0
    %762 = vmatprep.subr.mxu0 0.0
    %763 = vmatpush2.msra.mxu0 0.0
    %764 = vmatprep.subr.mxu0 0.0
    %765 = vmatpush2.msra.mxu0 0.0
    %766 = vmatprep.subr.mxu0 0.0
    %767 = vmatpush2.msra.mxu0 0.0
    %768 = vmatprep.subr.mxu0 0.0
    %769 = vmatpush2.msra.mxu0 0.0
    %770 = vmatprep.subr.mxu0 0.0
    %771 = vmatpush2.msra.mxu0 0.0
    %772 = vmatprep.subr.mxu0 0.0
    %773 = vmatpush2.msra.mxu0 0.0
    %774 = vmatprep.subr.mxu0 0.0
    %775 = vmatpush2.msra.mxu0 0.0
    %776 = vmatprep.subr.mxu0 0.0
    %777 = vmatpush2.msra.mxu0 0.0
    %778 = vmatprep.mubr.f32.mxu0 0.0
    %779 = vmatmul.mubr.f32.gmra.mxu0 %v641
    %v780 = vpop.f32.mrf.mxu0
    %v781 = vadd.f32 %v710, %v780
    %v782 = vpop.f32.mrf.mxu0
    %v783 = vadd.f32 %v712, %v782
    %784 = vdwg.mxu0
    %785 = vmatprep.subr.mxu0 0.0
    %786 = vmatpush1.msra.mxu0 %v275
    %787 = vmatprep.subr.mxu0 0.0
    %788 = vmatpush1.msra.mxu0 %v272
    %789 = vmatprep.subr.mxu0 0.0
    %790 = vmatpush1.msra.mxu0 %v269
    %791 = vmatprep.subr.mxu0 0.0
    %792 = vmatpush1.msra.mxu0 %v266
    %793 = vmatprep.subr.mxu0 0.0
    %794 = vmatpush1.msra.mxu0 %v263
    %795 = vmatprep.subr.mxu0 0.0
    %796 = vmatpush1.msra.mxu0 %v260
    %797 = vmatprep.subr.mxu0 0.0
    %798 = vmatpush1.msra.mxu0 %v257
    %799 = vmatprep.subr.mxu0 0.0
    %800 = vmatpush1.msra.mxu0 %v254
    %801 = vmatprep.subr.mxu0 0.0
    %802 = vmatpush1.msra.mxu0 %v251
    %803 = vmatprep.subr.mxu0 0.0
    %804 = vmatpush1.msra.mxu0 %v248
    %805 = vmatprep.subr.mxu0 0.0
    %806 = vmatpush1.msra.mxu0 %v245
    %807 = vmatprep.subr.mxu0 0.0
    %808 = vmatpush1.msra.mxu0 %v242
    %809 = vmatprep.subr.mxu0 0.0
    %810 = vmatpush1.msra.mxu0 %v239
    %811 = vmatprep.subr.mxu0 0.0
    %812 = vmatpush1.msra.mxu0 %v236
    %813 = vmatprep.subr.mxu0 0.0
    %814 = vmatpush1.msra.mxu0 %v233
    %815 = vmatprep.subr.mxu0 0.0
    %816 = vmatpush1.msra.mxu0 %v230
    %817 = vmatprep.subr.mxu0 0.0
    %818 = vmatpush2.msra.mxu0 %v323
    %819 = vmatprep.subr.mxu0 0.0
    %820 = vmatpush2.msra.mxu0 %v320
    %821 = vmatprep.subr.mxu0 0.0
    %822 = vmatpush2.msra.mxu0 %v317
    %823 = vmatprep.subr.mxu0 0.0
    %824 = vmatpush2.msra.mxu0 %v314
    %825 = vmatprep.subr.mxu0 0.0
    %826 = vmatpush2.msra.mxu0 %v311
    %827 = vmatprep.subr.mxu0 0.0
    %828 = vmatpush2.msra.mxu0 %v308
    %829 = vmatprep.subr.mxu0 0.0
    %830 = vmatpush2.msra.mxu0 %v305
    %831 = vmatprep.subr.mxu0 0.0
    %832 = vmatpush2.msra.mxu0 %v302
    %833 = vmatprep.subr.mxu0 0.0
    %834 = vmatpush2.msra.mxu0 %v299
    %835 = vmatprep.subr.mxu0 0.0
    %836 = vmatpush2.msra.mxu0 %v296
    %837 = vmatprep.subr.mxu0 0.0
    %838 = vmatpush2.msra.mxu0 %v293
    %839 = vmatprep.subr.mxu0 0.0
    %840 = vmatpush2.msra.mxu0 %v290
    %841 = vmatprep.subr.mxu0 0.0
    %842 = vmatpush2.msra.mxu0 %v287
    %843 = vmatprep.subr.mxu0 0.0
    %844 = vmatpush2.msra.mxu0 %v284
    %845 = vmatprep.subr.mxu0 0.0
    %846 = vmatpush2.msra.mxu0 %v281
    %847 = vmatprep.subr.mxu0 0.0
    %848 = vmatpush2.msra.mxu0 %v278
    %849 = vmatprep.mubr.f32.mxu0 %v638
    %850 = vmatmul.mubr.f32.gmra.mxu0 %v637
    %v851 = vpop.f32.mrf.mxu0
    %v852 = vadd.f32 0.0, %v851
    %v853 = vpop.f32.mrf.mxu0
    %854 = vdwg.mxu0
    %855 = vmatprep.subr.mxu0 0.0
    %856 = vmatpush1.msra.mxu0 0.0
    %857 = vmatprep.subr.mxu0 0.0
    %858 = vmatpush1.msra.mxu0 0.0
    %859 = vmatprep.subr.mxu0 0.0
    %860 = vmatpush1.msra.mxu0 0.0
    %861 = vmatprep.subr.mxu0 0.0
    %862 = vmatpush1.msra.mxu0 0.0
    %863 = vmatprep.subr.mxu0 0.0
    %864 = vmatpush1.msra.mxu0 0.0
    %865 = vmatprep.subr.mxu0 0.0
    %866 = vmatpush1.msra.mxu0 0.0
    %867 = vmatprep.subr.mxu0 0.0
    %868 = vmatpush1.msra.mxu0 0.0
    %869 = vmatprep.subr.mxu0 0.0
    %870 = vmatpush1.msra.mxu0 0.0
    %871 = vmatprep.subr.mxu0 0.0
    %872 = vmatpush1.msra.mxu0 %v347
    %873 = vmatprep.subr.mxu0 0.0
    %874 = vmatpush1.msra.mxu0 %v344
    %875 = vmatprep.subr.mxu0 0.0
    %876 = vmatpush1.msra.mxu0 %v341
    %877 = vmatprep.subr.mxu0 0.0
    %878 = vmatpush1.msra.mxu0 %v338
    %879 = vmatprep.subr.mxu0 0.0
    %880 = vmatpush1.msra.mxu0 %v335
    %881 = vmatprep.subr.mxu0 0.0
    %882 = vmatpush1.msra.mxu0 %v332
    %883 = vmatprep.subr.mxu0 0.0
    %884 = vmatpush1.msra.mxu0 %v329
    %885 = vmatprep.subr.mxu0 0.0
    %886 = vmatpush1.msra.mxu0 %v326
    %887 = vmatprep.subr.mxu0 0.0
    %888 = vmatpush2.msra.mxu0 0.0
    %889 = vmatprep.subr.mxu0 0.0
    %890 = vmatpush2.msra.mxu0 0.0
    %891 = vmatprep.subr.mxu0 0.0
    %892 = vmatpush2.msra.mxu0 0.0
    %893 = vmatprep.subr.mxu0 0.0
    %894 = vmatpush2.msra.mxu0 0.0
    %895 = vmatprep.subr.mxu0 0.0
    %896 = vmatpush2.msra.mxu0 0.0
    %897 = vmatprep.subr.mxu0 0.0
    %898 = vmatpush2.msra.mxu0 0.0
    %899 = vmatprep.subr.mxu0 0.0
    %900 = vmatpush2.msra.mxu0 0.0
    %901 = vmatprep.subr.mxu0 0.0
    %902 = vmatpush2.msra.mxu0 0.0
    %903 = vmatprep.subr.mxu0 0.0
    %904 = vmatpush2.msra.mxu0 0.0
    %905 = vmatprep.subr.mxu0 0.0
    %906 = vmatpush2.msra.mxu0 0.0
    %907 = vmatprep.subr.mxu0 0.0
    %908 = vmatpush2.msra.mxu0 0.0
    %909 = vmatprep.subr.mxu0 0.0
    %910 = vmatpush2.msra.mxu0 0.0
    %911 = vmatprep.subr.mxu0 0.0
    %912 = vmatpush2.msra.mxu0 0.0
    %913 = vmatprep.subr.mxu0 0.0
    %914 = vmatpush2.msra.mxu0 0.0
    %915 = vmatprep.subr.mxu0 0.0
    %916 = vmatpush2.msra.mxu0 0.0
    %917 = vmatprep.subr.mxu0 0.0
    %918 = vmatpush2.msra.mxu0 0.0
    %919 = vmatprep.mubr.f32.mxu0 0.0
    %920 = vmatmul.mubr.f32.gmra.mxu0 %v641
    %v921 = vpop.f32.mrf.mxu0
    %v922 = vadd.f32 %v852, %v921
    %v923 = vpop.f32.mrf.mxu0
    %924 = vdwg.mxu0
    %v928 = vrot.slane %v781, 6
    %v929 = vrot.slane %v783, 6
    %v930 = vrot.slane %v922, 6
    %v934 = vadd.f32 %v143, %v928
    %v935 = vadd.f32 %v145, %v929
    %v936 = vadd.f32 %v220, %v930
    %v937 = vtanh.pop %v934
    %v938 = vtanh.pop %v935
    %v939 = vtanh.pop %v936
    %v943 = vrot.slane %v937, 2
    %v944 = vrot.slane %v938, 2
    %v945 = vrot.slane %v939, 2
    %v948 = vsel %vm348, %v945, 0
    %950 = vmatprep.subr.mxu0 %v274
    %951 = vmatpush1.msra.mxu0 %v273
    %952 = vmatprep.subr.mxu0 %v271
    %953 = vmatpush1.msra.mxu0 %v270
    %954 = vmatprep.subr.mxu0 %v268
    %955 = vmatpush1.msra.mxu0 %v267
    %956 = vmatprep.subr.mxu0 %v265
    %957 = vmatpush1.msra.mxu0 %v264
    %958 = vmatprep.subr.mxu0 %v262
    %959 = vmatpush1.msra.mxu0 %v261
    %960 = vmatprep.subr.mxu0 %v259
    %961 = vmatpush1.msra.mxu0 %v258
    %962 = vmatprep.subr.mxu0 %v256
    %963 = vmatpush1.msra.mxu0 %v255
    %964 = vmatprep.subr.mxu0 %v253
    %965 = vmatpush1.msra.mxu0 %v252
    %966 = vmatprep.subr.mxu0 %v250
    %967 = vmatpush1.msra.mxu0 %v249
    %968 = vmatprep.subr.mxu0 %v247
    %969 = vmatpush1.msra.mxu0 %v246
    %970 = vmatprep.subr.mxu0 %v244
    %971 = vmatpush1.msra.mxu0 %v243
    %972 = vmatprep.subr.mxu0 %v241
    %973 = vmatpush1.msra.mxu0 %v240
    %974 = vmatprep.subr.mxu0 %v238
    %975 = vmatpush1.msra.mxu0 %v237
    %976 = vmatprep.subr.mxu0 %v235
    %977 = vmatpush1.msra.mxu0 %v234
    %978 = vmatprep.subr.mxu0 %v232
    %979 = vmatpush1.msra.mxu0 %v231
    %980 = vmatprep.subr.mxu0 %v229
    %981 = vmatpush1.msra.mxu0 %v228
    %982 = vmatprep.subr.mxu0 %v322
    %983 = vmatpush2.msra.mxu0 %v321
    %984 = vmatprep.subr.mxu0 %v319
    %985 = vmatpush2.msra.mxu0 %v318
    %986 = vmatprep.subr.mxu0 %v316
    %987 = vmatpush2.msra.mxu0 %v315
    %988 = vmatprep.subr.mxu0 %v313
    %989 = vmatpush2.msra.mxu0 %v312
    %990 = vmatprep.subr.mxu0 %v310
    %991 = vmatpush2.msra.mxu0 %v309
    %992 = vmatprep.subr.mxu0 %v307
    %993 = vmatpush2.msra.mxu0 %v306
    %994 = vmatprep.subr.mxu0 %v304
    %995 = vmatpush2.msra.mxu0 %v303
    %996 = vmatprep.subr.mxu0 %v301
    %997 = vmatpush2.msra.mxu0 %v300
    %998 = vmatprep.subr.mxu0 %v298
    %999 = vmatpush2.msra.mxu0 %v297
    %1000 = vmatprep.subr.mxu0 %v295
    %1001 = vmatpush2.msra.mxu0 %v294
    %1002 = vmatprep.subr.mxu0 %v292
    %1003 = vmatpush2.msra.mxu0 %v291
    %1004 = vmatprep.subr.mxu0 %v289
    %1005 = vmatpush2.msra.mxu0 %v288
    %1006 = vmatprep.subr.mxu0 %v286
    %1007 = vmatpush2.msra.mxu0 %v285
    %1008 = vmatprep.subr.mxu0 %v283
    %1009 = vmatpush2.msra.mxu0 %v282
    %1010 = vmatprep.subr.mxu0 %v280
    %1011 = vmatpush2.msra.mxu0 %v279
    %1012 = vmatprep.subr.mxu0 %v277
    %1013 = vmatpush2.msra.mxu0 %v276
    %1014 = vmatprep.mubr.f32.mxu0 %v944
    %1015 = vmatmul.mubr.f32.gmra.mxu0 %v943
    %v1016 = vpop.f32.mrf.mxu0
    %v1017 = vadd.f32 0.0, %v1016
    %v1018 = vpop.f32.mrf.mxu0
    %v1019 = vadd.f32 0.0, %v1018
    %1020 = vdwg.mxu0
    %1021 = vmatprep.subr.mxu0 0.0
    %1022 = vmatpush1.msra.mxu0 0.0
    %1023 = vmatprep.subr.mxu0 0.0
    %1024 = vmatpush1.msra.mxu0 0.0
    %1025 = vmatprep.subr.mxu0 0.0
    %1026 = vmatpush1.msra.mxu0 0.0
    %1027 = vmatprep.subr.mxu0 0.0
    %1028 = vmatpush1.msra.mxu0 0.0
    %1029 = vmatprep.subr.mxu0 0.0
    %1030 = vmatpush1.msra.mxu0 0.0
    %1031 = vmatprep.subr.mxu0 0.0
    %1032 = vmatpush1.msra.mxu0 0.0
    %1033 = vmatprep.subr.mxu0 0.0
    %1034 = vmatpush1.msra.mxu0 0.0
    %1035 = vmatprep.subr.mxu0 0.0
    %1036 = vmatpush1.msra.mxu0 0.0
    %1037 = vmatprep.subr.mxu0 %v346
    %1038 = vmatpush1.msra.mxu0 %v345
    %1039 = vmatprep.subr.mxu0 %v343
    %1040 = vmatpush1.msra.mxu0 %v342
    %1041 = vmatprep.subr.mxu0 %v340
    %1042 = vmatpush1.msra.mxu0 %v339
    %1043 = vmatprep.subr.mxu0 %v337
    %1044 = vmatpush1.msra.mxu0 %v336
    %1045 = vmatprep.subr.mxu0 %v334
    %1046 = vmatpush1.msra.mxu0 %v333
    %1047 = vmatprep.subr.mxu0 %v331
    %1048 = vmatpush1.msra.mxu0 %v330
    %1049 = vmatprep.subr.mxu0 %v328
    %1050 = vmatpush1.msra.mxu0 %v327
    %1051 = vmatprep.subr.mxu0 %v325
    %1052 = vmatpush1.msra.mxu0 %v324
    %1053 = vmatprep.subr.mxu0 0.0
    %1054 = vmatpush2.msra.mxu0 0.0
    %1055 = vmatprep.subr.mxu0 0.0
    %1056 = vmatpush2.msra.mxu0 0.0
    %1057 = vmatprep.subr.mxu0 0.0
    %1058 = vmatpush2.msra.mxu0 0.0
    %1059 = vmatprep.subr.mxu0 0.0
    %1060 = vmatpush2.msra.mxu0 0.0
    %1061 = vmatprep.subr.mxu0 0.0
    %1062 = vmatpush2.msra.mxu0 0.0
    %1063 = vmatprep.subr.mxu0 0.0
    %1064 = vmatpush2.msra.mxu0 0.0
    %1065 = vmatprep.subr.mxu0 0.0
    %1066 = vmatpush2.msra.mxu0 0.0
    %1067 = vmatprep.subr.mxu0 0.0
    %1068 = vmatpush2.msra.mxu0 0.0
    %1069 = vmatprep.subr.mxu0 0.0
    %1070 = vmatpush2.msra.mxu0 0.0
    %1071 = vmatprep.subr.mxu0 0.0
    %1072 = vmatpush2.msra.mxu0 0.0
    %1073 = vmatprep.subr.mxu0 0.0
    %1074 = vmatpush2.msra.mxu0 0.0
    %1075 = vmatprep.subr.mxu0 0.0
    %1076 = vmatpush2.msra.mxu0 0.0
    %1077 = vmatprep.subr.mxu0 0.0
    %1078 = vmatpush2.msra.mxu0 0.0
    %1079 = vmatprep.subr.mxu0 0.0
    %1080 = vmatpush2.msra.mxu0 0.0
    %1081 = vmatprep.subr.mxu0 0.0
    %1082 = vmatpush2.msra.mxu0 0.0
    %1083 = vmatprep.subr.mxu0 0.0
    %1084 = vmatpush2.msra.mxu0 0.0
    %1085 = vmatprep.mubr.f32.mxu0 0.0
    %1086 = vmatmul.mubr.f32.gmra.mxu0 %v948
    %v1087 = vpop.f32.mrf.mxu0
    %v1088 = vadd.f32 %v1017, %v1087
    %v1089 = vpop.f32.mrf.mxu0
    %v1090 = vadd.f32 %v1019, %v1089
    %1091 = vdwg.mxu0
    %1092 = vmatprep.subr.mxu0 0.0
    %1093 = vmatpush1.msra.mxu0 %v275
    %1094 = vmatprep.subr.mxu0 0.0
    %1095 = vmatpush1.msra.mxu0 %v272
    %1096 = vmatprep.subr.mxu0 0.0
    %1097 = vmatpush1.msra.mxu0 %v269
    %1098 = vmatprep.subr.mxu0 0.0
    %1099 = vmatpush1.msra.mxu0 %v266
    %1100 = vmatprep.subr.mxu0 0.0
    %1101 = vmatpush1.msra.mxu0 %v263
    %1102 = vmatprep.subr.mxu0 0.0
    %1103 = vmatpush1.msra.mxu0 %v260
    %1104 = vmatprep.subr.mxu0 0.0
    %1105 = vmatpush1.msra.mxu0 %v257
    %1106 = vmatprep.subr.mxu0 0.0
    %1107 = vmatpush1.msra.mxu0 %v254
    %1108 = vmatprep.subr.mxu0 0.0
    %1109 = vmatpush1.msra.mxu0 %v251
    %1110 = vmatprep.subr.mxu0 0.0
    %1111 = vmatpush1.msra.mxu0 %v248
    %1112 = vmatprep.subr.mxu0 0.0
    %1113 = vmatpush1.msra.mxu0 %v245
    %1114 = vmatprep.subr.mxu0 0.0
    %1115 = vmatpush1.msra.mxu0 %v242
    %1116 = vmatprep.subr.mxu0 0.0
    %1117 = vmatpush1.msra.mxu0 %v239
    %1118 = vmatprep.subr.mxu0 0.0
    %1119 = vmatpush1.msra.mxu0 %v236
    %1120 = vmatprep.subr.mxu0 0.0
    %1121 = vmatpush1.msra.mxu0 %v233
    %1122 = vmatprep.subr.mxu0 0.0
    %1123 = vmatpush1.msra.mxu0 %v230
    %1124 = vmatprep.subr.mxu0 0.0
    %1125 = vmatpush2.msra.mxu0 %v323
    %1126 = vmatprep.subr.mxu0 0.0
    %1127 = vmatpush2.msra.mxu0 %v320
    %1128 = vmatprep.subr.mxu0 0.0
    %1129 = vmatpush2.msra.mxu0 %v317
    %1130 = vmatprep.subr.mxu0 0.0
    %1131 = vmatpush2.msra.mxu0 %v314
    %1132 = vmatprep.subr.mxu0 0.0
    %1133 = vmatpush2.msra.mxu0 %v311
    %1134 = vmatprep.subr.mxu0 0.0
    %1135 = vmatpush2.msra.mxu0 %v308
    %1136 = vmatprep.subr.mxu0 0.0
    %1137 = vmatpush2.msra.mxu0 %v305
    %1138 = vmatprep.subr.mxu0 0.0
    %1139 = vmatpush2.msra.mxu0 %v302
    %1140 = vmatprep.subr.mxu0 0.0
    %1141 = vmatpush2.msra.mxu0 %v299
    %1142 = vmatprep.subr.mxu0 0.0
    %1143 = vmatpush2.msra.mxu0 %v296
    %1144 = vmatprep.subr.mxu0 0.0
    %1145 = vmatpush2.msra.mxu0 %v293
    %1146 = vmatprep.subr.mxu0 0.0
    %1147 = vmatpush2.msra.mxu0 %v290
    %1148 = vmatprep.subr.mxu0 0.0
    %1149 = vmatpush2.msra.mxu0 %v287
    %1150 = vmatprep.subr.mxu0 0.0
    %1151 = vmatpush2.msra.mxu0 %v284
    %1152 = vmatprep.subr.mxu0 0.0
    %1153 = vmatpush2.msra.mxu0 %v281
    %1154 = vmatprep.subr.mxu0 0.0
    %1155 = vmatpush2.msra.mxu0 %v278
    %1156 = vmatprep.mubr.f32.mxu0 %v944
    %1157 = vmatmul.mubr.f32.gmra.mxu0 %v943
    %v1158 = vpop.f32.mrf.mxu0
    %v1159 = vadd.f32 0.0, %v1158
    %v1160 = vpop.f32.mrf.mxu0
    %1161 = vdwg.mxu0
    %1162 = vmatprep.subr.mxu0 0.0
    %1163 = vmatpush1.msra.mxu0 0.0
    %1164 = vmatprep.subr.mxu0 0.0
    %1165 = vmatpush1.msra.mxu0 0.0
    %1166 = vmatprep.subr.mxu0 0.0
    %1167 = vmatpush1.msra.mxu0 0.0
    %1168 = vmatprep.subr.mxu0 0.0
    %1169 = vmatpush1.msra.mxu0 0.0
    %1170 = vmatprep.subr.mxu0 0.0
    %1171 = vmatpush1.msra.mxu0 0.0
    %1172 = vmatprep.subr.mxu0 0.0
    %1173 = vmatpush1.msra.mxu0 0.0
    %1174 = vmatprep.subr.mxu0 0.0
    %1175 = vmatpush1.msra.mxu0 0.0
    %1176 = vmatprep.subr.mxu0 0.0
    %1177 = vmatpush1.msra.mxu0 0.0
    %1178 = vmatprep.subr.mxu0 0.0
    %1179 = vmatpush1.msra.mxu0 %v347
    %1180 = vmatprep.subr.mxu0 0.0
    %1181 = vmatpush1.msra.mxu0 %v344
    %1182 = vmatprep.subr.mxu0 0.0
    %1183 = vmatpush1.msra.mxu0 %v341
    %1184 = vmatprep.subr.mxu0 0.0
    %1185 = vmatpush1.msra.mxu0 %v338
    %1186 = vmatprep.subr.mxu0 0.0
    %1187 = vmatpush1.msra.mxu0 %v335
    %1188 = vmatprep.subr.mxu0 0.0
    %1189 = vmatpush1.msra.mxu0 %v332
    %1190 = vmatprep.subr.mxu0 0.0
    %1191 = vmatpush1.msra.mxu0 %v329
    %1192 = vmatprep.subr.mxu0 0.0
    %1193 = vmatpush1.msra.mxu0 %v326
    %1194 = vmatprep.subr.mxu0 0.0
    %1195 = vmatpush2.msra.mxu0 0.0
    %1196 = vmatprep.subr.mxu0 0.0
    %1197 = vmatpush2.msra.mxu0 0.0
    %1198 = vmatprep.subr.mxu0 0.0
    %1199 = vmatpush2.msra.mxu0 0.0
    %1200 = vmatprep.subr.mxu0 0.0
    %1201 = vmatpush2.msra.mxu0 0.0
    %1202 = vmatprep.subr.mxu0 0.0
    %1203 = vmatpush2.msra.mxu0 0.0
    %1204 = vmatprep.subr.mxu0 0.0
    %1205 = vmatpush2.msra.mxu0 0.0
    %1206 = vmatprep.subr.mxu0 0.0
    %1207 = vmatpush2.msra.mxu0 0.0
    %1208 = vmatprep.subr.mxu0 0.0
    %1209 = vmatpush2.msra.mxu0 0.0
    %1210 = vmatprep.subr.mxu0 0.0
    %1211 = vmatpush2.msra.mxu0 0.0
    %1212 = vmatprep.subr.mxu0 0.0
    %1213 = vmatpush2.msra.mxu0 0.0
    %1214 = vmatprep.subr.mxu0 0.0
    %1215 = vmatpush2.msra.mxu0 0.0
    %1216 = vmatprep.subr.mxu0 0.0
    %1217 = vmatpush2.msra.mxu0 0.0
    %1218 = vmatprep.subr.mxu0 0.0
    %1219 = vmatpush2.msra.mxu0 0.0
    %1220 = vmatprep.subr.mxu0 0.0
    %1221 = vmatpush2.msra.mxu0 0.0
    %1222 = vmatprep.subr.mxu0 0.0
    %1223 = vmatpush2.msra.mxu0 0.0
    %1224 = vmatprep.subr.mxu0 0.0
    %1225 = vmatpush2.msra.mxu0 0.0
    %1226 = vmatprep.mubr.f32.mxu0 0.0
    %1227 = vmatmul.mubr.f32.gmra.mxu0 %v948
    %v1228 = vpop.f32.mrf.mxu0
    %v1229 = vadd.f32 %v1159, %v1228
    %v1230 = vpop.f32.mrf.mxu0
    %1231 = vdwg.mxu0
    %v1235 = vrot.slane %v1088, 4
    %v1236 = vrot.slane %v1090, 4
    %v1237 = vrot.slane %v1229, 4
    %v1241 = vadd.f32 %v143, %v1235
    %v1242 = vadd.f32 %v145, %v1236
    %v1243 = vadd.f32 %v220, %v1237
    %v1244 = vtanh.pop %v1241
    %v1245 = vtanh.pop %v1242
    %v1246 = vtanh.pop %v1243
    %v1250 = vrot.slane %v1244, 4
    %v1251 = vrot.slane %v1245, 4
    %v1252 = vrot.slane %v1246, 4
    %v1255 = vsel %vm348, %v1252, 0
    %1257 = vmatprep.subr.mxu0 %v274
    %1258 = vmatpush1.msra.mxu0 %v273
    %1259 = vmatprep.subr.mxu0 %v271
    %1260 = vmatpush1.msra.mxu0 %v270
    %1261 = vmatprep.subr.mxu0 %v268
    %1262 = vmatpush1.msra.mxu0 %v267
    %1263 = vmatprep.subr.mxu0 %v265
    %1264 = vmatpush1.msra.mxu0 %v264
    %1265 = vmatprep.subr.mxu0 %v262
    %1266 = vmatpush1.msra.mxu0 %v261
    %1267 = vmatprep.subr.mxu0 %v259
    %1268 = vmatpush1.msra.mxu0 %v258
    %1269 = vmatprep.subr.mxu0 %v256
    %1270 = vmatpush1.msra.mxu0 %v255
    %1271 = vmatprep.subr.mxu0 %v253
    %1272 = vmatpush1.msra.mxu0 %v252
    %1273 = vmatprep.subr.mxu0 %v250
    %1274 = vmatpush1.msra.mxu0 %v249
    %1275 = vmatprep.subr.mxu0 %v247
    %1276 = vmatpush1.msra.mxu0 %v246
    %1277 = vmatprep.subr.mxu0 %v244
    %1278 = vmatpush1.msra.mxu0 %v243
    %1279 = vmatprep.subr.mxu0 %v241
    %1280 = vmatpush1.msra.mxu0 %v240
    %1281 = vmatprep.subr.mxu0 %v238
    %1282 = vmatpush1.msra.mxu0 %v237
    %1283 = vmatprep.subr.mxu0 %v235
    %1284 = vmatpush1.msra.mxu0 %v234
    %1285 = vmatprep.subr.mxu0 %v232
    %1286 = vmatpush1.msra.mxu0 %v231
    %1287 = vmatprep.subr.mxu0 %v229
    %1288 = vmatpush1.msra.mxu0 %v228
    %1289 = vmatprep.subr.mxu0 %v322
    %1290 = vmatpush2.msra.mxu0 %v321
    %1291 = vmatprep.subr.mxu0 %v319
    %1292 = vmatpush2.msra.mxu0 %v318
    %1293 = vmatprep.subr.mxu0 %v316
    %1294 = vmatpush2.msra.mxu0 %v315
    %1295 = vmatprep.subr.mxu0 %v313
    %1296 = vmatpush2.msra.mxu0 %v312
    %1297 = vmatprep.subr.mxu0 %v310
    %1298 = vmatpush2.msra.mxu0 %v309
    %1299 = vmatprep.subr.mxu0 %v307
    %1300 = vmatpush2.msra.mxu0 %v306
    %1301 = vmatprep.subr.mxu0 %v304
    %1302 = vmatpush2.msra.mxu0 %v303
    %1303 = vmatprep.subr.mxu0 %v301
    %1304 = vmatpush2.msra.mxu0 %v300
    %1305 = vmatprep.subr.mxu0 %v298
    %1306 = vmatpush2.msra.mxu0 %v297
    %1307 = vmatprep.subr.mxu0 %v295
    %1308 = vmatpush2.msra.mxu0 %v294
    %1309 = vmatprep.subr.mxu0 %v292
    %1310 = vmatpush2.msra.mxu0 %v291
    %1311 = vmatprep.subr.mxu0 %v289
    %1312 = vmatpush2.msra.mxu0 %v288
    %1313 = vmatprep.subr.mxu0 %v286
    %1314 = vmatpush2.msra.mxu0 %v285
    %1315 = vmatprep.subr.mxu0 %v283
    %1316 = vmatpush2.msra.mxu0 %v282
    %1317 = vmatprep.subr.mxu0 %v280
    %1318 = vmatpush2.msra.mxu0 %v279
    %1319 = vmatprep.subr.mxu0 %v277
    %1320 = vmatpush2.msra.mxu0 %v276
    %1321 = vmatprep.mubr.f32.mxu0 %v1251
    %1322 = vmatmul.mubr.f32.gmra.mxu0 %v1250
    %v1323 = vpop.f32.mrf.mxu0
    %v1324 = vadd.f32 0.0, %v1323
    %v1325 = vpop.f32.mrf.mxu0
    %v1326 = vadd.f32 0.0, %v1325
    %1327 = vdwg.mxu0
    %1328 = vmatprep.subr.mxu0 0.0
    %1329 = vmatpush1.msra.mxu0 0.0
    %1330 = vmatprep.subr.mxu0 0.0
    %1331 = vmatpush1.msra.mxu0 0.0
    %1332 = vmatprep.subr.mxu0 0.0
    %1333 = vmatpush1.msra.mxu0 0.0
    %1334 = vmatprep.subr.mxu0 0.0
    %1335 = vmatpush1.msra.mxu0 0.0
    %1336 = vmatprep.subr.mxu0 0.0
    %1337 = vmatpush1.msra.mxu0 0.0
    %1338 = vmatprep.subr.mxu0 0.0
    %1339 = vmatpush1.msra.mxu0 0.0
    %1340 = vmatprep.subr.mxu0 0.0
    %1341 = vmatpush1.msra.mxu0 0.0
    %1342 = vmatprep.subr.mxu0 0.0
    %1343 = vmatpush1.msra.mxu0 0.0
    %1344 = vmatprep.subr.mxu0 %v346
    %1345 = vmatpush1.msra.mxu0 %v345
    %1346 = vmatprep.subr.mxu0 %v343
    %1347 = vmatpush1.msra.mxu0 %v342
    %1348 = vmatprep.subr.mxu0 %v340
    %1349 = vmatpush1.msra.mxu0 %v339
    %1350 = vmatprep.subr.mxu0 %v337
    %1351 = vmatpush1.msra.mxu0 %v336
    %1352 = vmatprep.subr.mxu0 %v334
    %1353 = vmatpush1.msra.mxu0 %v333
    %1354 = vmatprep.subr.mxu0 %v331
    %1355 = vmatpush1.msra.mxu0 %v330
    %1356 = vmatprep.subr.mxu0 %v328
    %1357 = vmatpush1.msra.mxu0 %v327
    %1358 = vmatprep.subr.mxu0 %v325
    %1359 = vmatpush1.msra.mxu0 %v324
    %1360 = vmatprep.subr.mxu0 0.0
    %1361 = vmatpush2.msra.mxu0 0.0
    %1362 = vmatprep.subr.mxu0 0.0
    %1363 = vmatpush2.msra.mxu0 0.0
    %1364 = vmatprep.subr.mxu0 0.0
    %1365 = vmatpush2.msra.mxu0 0.0
    %1366 = vmatprep.subr.mxu0 0.0
    %1367 = vmatpush2.msra.mxu0 0.0
    %1368 = vmatprep.subr.mxu0 0.0
    %1369 = vmatpush2.msra.mxu0 0.0
    %1370 = vmatprep.subr.mxu0 0.0
    %1371 = vmatpush2.msra.mxu0 0.0
    %1372 = vmatprep.subr.mxu0 0.0
    %1373 = vmatpush2.msra.mxu0 0.0
    %1374 = vmatprep.subr.mxu0 0.0
    %1375 = vmatpush2.msra.mxu0 0.0
    %1376 = vmatprep.subr.mxu0 0.0
    %1377 = vmatpush2.msra.mxu0 0.0
    %1378 = vmatprep.subr.mxu0 0.0
    %1379 = vmatpush2.msra.mxu0 0.0
    %1380 = vmatprep.subr.mxu0 0.0
    %1381 = vmatpush2.msra.mxu0 0.0
    %1382 = vmatprep.subr.mxu0 0.0
    %1383 = vmatpush2.msra.mxu0 0.0
    %1384 = vmatprep.subr.mxu0 0.0
    %1385 = vmatpush2.msra.mxu0 0.0
    %1386 = vmatprep.subr.mxu0 0.0
    %1387 = vmatpush2.msra.mxu0 0.0
    %1388 = vmatprep.subr.mxu0 0.0
    %1389 = vmatpush2.msra.mxu0 0.0
    %1390 = vmatprep.subr.mxu0 0.0
    %1391 = vmatpush2.msra.mxu0 0.0
    %1392 = vmatprep.mubr.f32.mxu0 0.0
    %1393 = vmatmul.mubr.f32.gmra.mxu0 %v1255
    %v1394 = vpop.f32.mrf.mxu0
    %v1395 = vadd.f32 %v1324, %v1394
    %v1396 = vpop.f32.mrf.mxu0
    %v1397 = vadd.f32 %v1326, %v1396
    %1398 = vdwg.mxu0
    %1399 = vmatprep.subr.mxu0 0.0
    %1400 = vmatpush1.msra.mxu0 %v275
    %1401 = vmatprep.subr.mxu0 0.0
    %1402 = vmatpush1.msra.mxu0 %v272
    %1403 = vmatprep.subr.mxu0 0.0
    %1404 = vmatpush1.msra.mxu0 %v269
    %1405 = vmatprep.subr.mxu0 0.0
    %1406 = vmatpush1.msra.mxu0 %v266
    %1407 = vmatprep.subr.mxu0 0.0
    %1408 = vmatpush1.msra.mxu0 %v263
    %1409 = vmatprep.subr.mxu0 0.0
    %1410 = vmatpush1.msra.mxu0 %v260
    %1411 = vmatprep.subr.mxu0 0.0
    %1412 = vmatpush1.msra.mxu0 %v257
    %1413 = vmatprep.subr.mxu0 0.0
    %1414 = vmatpush1.msra.mxu0 %v254
    %1415 = vmatprep.subr.mxu0 0.0
    %1416 = vmatpush1.msra.mxu0 %v251
    %1417 = vmatprep.subr.mxu0 0.0
    %1418 = vmatpush1.msra.mxu0 %v248
    %1419 = vmatprep.subr.mxu0 0.0
    %1420 = vmatpush1.msra.mxu0 %v245
    %1421 = vmatprep.subr.mxu0 0.0
    %1422 = vmatpush1.msra.mxu0 %v242
    %1423 = vmatprep.subr.mxu0 0.0
    %1424 = vmatpush1.msra.mxu0 %v239
    %1425 = vmatprep.subr.mxu0 0.0
    %1426 = vmatpush1.msra.mxu0 %v236
    %1427 = vmatprep.subr.mxu0 0.0
    %1428 = vmatpush1.msra.mxu0 %v233
    %1429 = vmatprep.subr.mxu0 0.0
    %1430 = vmatpush1.msra.mxu0 %v230
    %1431 = vmatprep.subr.mxu0 0.0
    %1432 = vmatpush2.msra.mxu0 %v323
    %1433 = vmatprep.subr.mxu0 0.0
    %1434 = vmatpush2.msra.mxu0 %v320
    %1435 = vmatprep.subr.mxu0 0.0
    %1436 = vmatpush2.msra.mxu0 %v317
    %1437 = vmatprep.subr.mxu0 0.0
    %1438 = vmatpush2.msra.mxu0 %v314
    %1439 = vmatprep.subr.mxu0 0.0
    %1440 = vmatpush2.msra.mxu0 %v311
    %1441 = vmatprep.subr.mxu0 0.0
    %1442 = vmatpush2.msra.mxu0 %v308
    %1443 = vmatprep.subr.mxu0 0.0
    %1444 = vmatpush2.msra.mxu0 %v305
    %1445 = vmatprep.subr.mxu0 0.0
    %1446 = vmatpush2.msra.mxu0 %v302
    %1447 = vmatprep.subr.mxu0 0.0
    %1448 = vmatpush2.msra.mxu0 %v299
    %1449 = vmatprep.subr.mxu0 0.0
    %1450 = vmatpush2.msra.mxu0 %v296
    %1451 = vmatprep.subr.mxu0 0.0
    %1452 = vmatpush2.msra.mxu0 %v293
    %1453 = vmatprep.subr.mxu0 0.0
    %1454 = vmatpush2.msra.mxu0 %v290
    %1455 = vmatprep.subr.mxu0 0.0
    %1456 = vmatpush2.msra.mxu0 %v287
    %1457 = vmatprep.subr.mxu0 0.0
    %1458 = vmatpush2.msra.mxu0 %v284
    %1459 = vmatprep.subr.mxu0 0.0
    %1460 = vmatpush2.msra.mxu0 %v281
    %1461 = vmatprep.subr.mxu0 0.0
    %1462 = vmatpush2.msra.mxu0 %v278
    %1463 = vmatprep.mubr.f32.mxu0 %v1251
    %1464 = vmatmul.mubr.f32.gmra.mxu0 %v1250
    %v1465 = vpop.f32.mrf.mxu0
    %v1466 = vadd.f32 0.0, %v1465
    %v1467 = vpop.f32.mrf.mxu0
    %1468 = vdwg.mxu0
    %1469 = vmatprep.subr.mxu0 0.0
    %1470 = vmatpush1.msra.mxu0 0.0
    %1471 = vmatprep.subr.mxu0 0.0
    %1472 = vmatpush1.msra.mxu0 0.0
    %1473 = vmatprep.subr.mxu0 0.0
    %1474 = vmatpush1.msra.mxu0 0.0
    %1475 = vmatprep.subr.mxu0 0.0
    %1476 = vmatpush1.msra.mxu0 0.0
    %1477 = vmatprep.subr.mxu0 0.0
    %1478 = vmatpush1.msra.mxu0 0.0
    %1479 = vmatprep.subr.mxu0 0.0
    %1480 = vmatpush1.msra.mxu0 0.0
    %1481 = vmatprep.subr.mxu0 0.0
    %1482 = vmatpush1.msra.mxu0 0.0
    %1483 = vmatprep.subr.mxu0 0.0
    %1484 = vmatpush1.msra.mxu0 0.0
    %1485 = vmatprep.subr.mxu0 0.0
    %1486 = vmatpush1.msra.mxu0 %v347
    %1487 = vmatprep.subr.mxu0 0.0
    %1488 = vmatpush1.msra.mxu0 %v344
    %1489 = vmatprep.subr.mxu0 0.0
    %1490 = vmatpush1.msra.mxu0 %v341
    %1491 = vmatprep.subr.mxu0 0.0
    %1492 = vmatpush1.msra.mxu0 %v338
    %1493 = vmatprep.subr.mxu0 0.0
    %1494 = vmatpush1.msra.mxu0 %v335
    %1495 = vmatprep.subr.mxu0 0.0
    %1496 = vmatpush1.msra.mxu0 %v332
    %1497 = vmatprep.subr.mxu0 0.0
    %1498 = vmatpush1.msra.mxu0 %v329
    %1499 = vmatprep.subr.mxu0 0.0
    %1500 = vmatpush1.msra.mxu0 %v326
    %1501 = vmatprep.subr.mxu0 0.0
    %1502 = vmatpush2.msra.mxu0 0.0
    %1503 = vmatprep.subr.mxu0 0.0
    %1504 = vmatpush2.msra.mxu0 0.0
    %1505 = vmatprep.subr.mxu0 0.0
    %1506 = vmatpush2.msra.mxu0 0.0
    %1507 = vmatprep.subr.mxu0 0.0
    %1508 = vmatpush2.msra.mxu0 0.0
    %1509 = vmatprep.subr.mxu0 0.0
    %1510 = vmatpush2.msra.mxu0 0.0
    %1511 = vmatprep.subr.mxu0 0.0
    %1512 = vmatpush2.msra.mxu0 0.0
    %1513 = vmatprep.subr.mxu0 0.0
    %1514 = vmatpush2.msra.mxu0 0.0
    %1515 = vmatprep.subr.mxu0 0.0
    %1516 = vmatpush2.msra.mxu0 0.0
    %1517 = vmatprep.subr.mxu0 0.0
    %1518 = vmatpush2.msra.mxu0 0.0
    %1519 = vmatprep.subr.mxu0 0.0
    %1520 = vmatpush2.msra.mxu0 0.0
    %1521 = vmatprep.subr.mxu0 0.0
    %1522 = vmatpush2.msra.mxu0 0.0
    %1523 = vmatprep.subr.mxu0 0.0
    %1524 = vmatpush2.msra.mxu0 0.0
    %1525 = vmatprep.subr.mxu0 0.0
    %1526 = vmatpush2.msra.mxu0 0.0
    %1527 = vmatprep.subr.mxu0 0.0
    %1528 = vmatpush2.msra.mxu0 0.0
    %1529 = vmatprep.subr.mxu0 0.0
    %1530 = vmatpush2.msra.mxu0 0.0
    %1531 = vmatprep.subr.mxu0 0.0
    %1532 = vmatpush2.msra.mxu0 0.0
    %1533 = vmatprep.mubr.f32.mxu0 0.0
    %1534 = vmatmul.mubr.f32.gmra.mxu0 %v1255
    %v1535 = vpop.f32.mrf.mxu0
    %v1536 = vadd.f32 %v1466, %v1535
    %v1537 = vpop.f32.mrf.mxu0
    %1538 = vdwg.mxu0
    %v1542 = vrot.slane %v1395, 2
    %v1543 = vrot.slane %v1397, 2
    %v1544 = vrot.slane %v1536, 2
    %v1548 = vadd.f32 %v143, %v1542
    %v1549 = vadd.f32 %v145, %v1543
    %v1550 = vadd.f32 %v220, %v1544
    %v1551 = vtanh.pop %v1548
    %v1552 = vtanh.pop %v1549
    %v1553 = vtanh.pop %v1550
    %v1557 = vrot.slane %v1551, 6
    %v1558 = vrot.slane %v1552, 6
    %v1559 = vrot.slane %v1553, 6
    %v1562 = vsel %vm348, %v1559, 0
    %1564 = vmatprep.subr.mxu0 %v274
    %1565 = vmatpush1.msra.mxu0 %v273
    %1566 = vmatprep.subr.mxu0 %v271
    %1567 = vmatpush1.msra.mxu0 %v270
    %1568 = vmatprep.subr.mxu0 %v268
    %1569 = vmatpush1.msra.mxu0 %v267
    %1570 = vmatprep.subr.mxu0 %v265
    %1571 = vmatpush1.msra.mxu0 %v264
    %1572 = vmatprep.subr.mxu0 %v262
    %1573 = vmatpush1.msra.mxu0 %v261
    %1574 = vmatprep.subr.mxu0 %v259
    %1575 = vmatpush1.msra.mxu0 %v258
    %1576 = vmatprep.subr.mxu0 %v256
    %1577 = vmatpush1.msra.mxu0 %v255
    %1578 = vmatprep.subr.mxu0 %v253
    %1579 = vmatpush1.msra.mxu0 %v252
    %1580 = vmatprep.subr.mxu0 %v250
    %1581 = vmatpush1.msra.mxu0 %v249
    %1582 = vmatprep.subr.mxu0 %v247
    %1583 = vmatpush1.msra.mxu0 %v246
    %1584 = vmatprep.subr.mxu0 %v244
    %1585 = vmatpush1.msra.mxu0 %v243
    %1586 = vmatprep.subr.mxu0 %v241
    %1587 = vmatpush1.msra.mxu0 %v240
    %1588 = vmatprep.subr.mxu0 %v238
    %1589 = vmatpush1.msra.mxu0 %v237
    %1590 = vmatprep.subr.mxu0 %v235
    %1591 = vmatpush1.msra.mxu0 %v234
    %1592 = vmatprep.subr.mxu0 %v232
    %1593 = vmatpush1.msra.mxu0 %v231
    %1594 = vmatprep.subr.mxu0 %v229
    %1595 = vmatpush1.msra.mxu0 %v228
    %1596 = vmatprep.subr.mxu0 %v322
    %1597 = vmatpush2.msra.mxu0 %v321
    %1598 = vmatprep.subr.mxu0 %v319
    %1599 = vmatpush2.msra.mxu0 %v318
    %1600 = vmatprep.subr.mxu0 %v316
    %1601 = vmatpush2.msra.mxu0 %v315
    %1602 = vmatprep.subr.mxu0 %v313
    %1603 = vmatpush2.msra.mxu0 %v312
    %1604 = vmatprep.subr.mxu0 %v310
    %1605 = vmatpush2.msra.mxu0 %v309
    %1606 = vmatprep.subr.mxu0 %v307
    %1607 = vmatpush2.msra.mxu0 %v306
    %1608 = vmatprep.subr.mxu0 %v304
    %1609 = vmatpush2.msra.mxu0 %v303
    %1610 = vmatprep.subr.mxu0 %v301
    %1611 = vmatpush2.msra.mxu0 %v300
    %1612 = vmatprep.subr.mxu0 %v298
    %1613 = vmatpush2.msra.mxu0 %v297
    %1614 = vmatprep.subr.mxu0 %v295
    %1615 = vmatpush2.msra.mxu0 %v294
    %1616 = vmatprep.subr.mxu0 %v292
    %1617 = vmatpush2.msra.mxu0 %v291
    %1618 = vmatprep.subr.mxu0 %v289
    %1619 = vmatpush2.msra.mxu0 %v288
    %1620 = vmatprep.subr.mxu0 %v286
    %1621 = vmatpush2.msra.mxu0 %v285
    %1622 = vmatprep.subr.mxu0 %v283
    %1623 = vmatpush2.msra.mxu0 %v282
    %1624 = vmatprep.subr.mxu0 %v280
    %1625 = vmatpush2.msra.mxu0 %v279
    %1626 = vmatprep.subr.mxu0 %v277
    %1627 = vmatpush2.msra.mxu0 %v276
    %1628 = vmatprep.mubr.f32.mxu0 %v1558
    %1629 = vmatmul.mubr.f32.gmra.mxu0 %v1557
    %v1630 = vpop.f32.mrf.mxu0
    %v1631 = vadd.f32 0.0, %v1630
    %v1632 = vpop.f32.mrf.mxu0
    %v1633 = vadd.f32 0.0, %v1632
    %1634 = vdwg.mxu0
    %1635 = vmatprep.subr.mxu0 0.0
    %1636 = vmatpush1.msra.mxu0 0.0
    %1637 = vmatprep.subr.mxu0 0.0
    %1638 = vmatpush1.msra.mxu0 0.0
    %1639 = vmatprep.subr.mxu0 0.0
    %1640 = vmatpush1.msra.mxu0 0.0
    %1641 = vmatprep.subr.mxu0 0.0
    %1642 = vmatpush1.msra.mxu0 0.0
    %1643 = vmatprep.subr.mxu0 0.0
    %1644 = vmatpush1.msra.mxu0 0.0
    %1645 = vmatprep.subr.mxu0 0.0
    %1646 = vmatpush1.msra.mxu0 0.0
    %1647 = vmatprep.subr.mxu0 0.0
    %1648 = vmatpush1.msra.mxu0 0.0
    %1649 = vmatprep.subr.mxu0 0.0
    %1650 = vmatpush1.msra.mxu0 0.0
    %1651 = vmatprep.subr.mxu0 %v346
    %1652 = vmatpush1.msra.mxu0 %v345
    %1653 = vmatprep.subr.mxu0 %v343
    %1654 = vmatpush1.msra.mxu0 %v342
    %1655 = vmatprep.subr.mxu0 %v340
    %1656 = vmatpush1.msra.mxu0 %v339
    %1657 = vmatprep.subr.mxu0 %v337
    %1658 = vmatpush1.msra.mxu0 %v336
    %1659 = vmatprep.subr.mxu0 %v334
    %1660 = vmatpush1.msra.mxu0 %v333
    %1661 = vmatprep.subr.mxu0 %v331
    %1662 = vmatpush1.msra.mxu0 %v330
    %1663 = vmatprep.subr.mxu0 %v328
    %1664 = vmatpush1.msra.mxu0 %v327
    %1665 = vmatprep.subr.mxu0 %v325
    %1666 = vmatpush1.msra.mxu0 %v324
    %1667 = vmatprep.subr.mxu0 0.0
    %1668 = vmatpush2.msra.mxu0 0.0
    %1669 = vmatprep.subr.mxu0 0.0
    %1670 = vmatpush2.msra.mxu0 0.0
    %1671 = vmatprep.subr.mxu0 0.0
    %1672 = vmatpush2.msra.mxu0 0.0
    %1673 = vmatprep.subr.mxu0 0.0
    %1674 = vmatpush2.msra.mxu0 0.0
    %1675 = vmatprep.subr.mxu0 0.0
    %1676 = vmatpush2.msra.mxu0 0.0
    %1677 = vmatprep.subr.mxu0 0.0
    %1678 = vmatpush2.msra.mxu0 0.0
    %1679 = vmatprep.subr.mxu0 0.0
    %1680 = vmatpush2.msra.mxu0 0.0
    %1681 = vmatprep.subr.mxu0 0.0
    %1682 = vmatpush2.msra.mxu0 0.0
    %1683 = vmatprep.subr.mxu0 0.0
    %1684 = vmatpush2.msra.mxu0 0.0
    %1685 = vmatprep.subr.mxu0 0.0
    %1686 = vmatpush2.msra.mxu0 0.0
    %1687 = vmatprep.subr.mxu0 0.0
    %1688 = vmatpush2.msra.mxu0 0.0
    %1689 = vmatprep.subr.mxu0 0.0
    %1690 = vmatpush2.msra.mxu0 0.0
    %1691 = vmatprep.subr.mxu0 0.0
    %1692 = vmatpush2.msra.mxu0 0.0
    %1693 = vmatprep.subr.mxu0 0.0
    %1694 = vmatpush2.msra.mxu0 0.0
    %1695 = vmatprep.subr.mxu0 0.0
    %1696 = vmatpush2.msra.mxu0 0.0
    %1697 = vmatprep.subr.mxu0 0.0
    %1698 = vmatpush2.msra.mxu0 0.0
    %1699 = vmatprep.mubr.f32.mxu0 0.0
    %1700 = vmatmul.mubr.f32.gmra.mxu0 %v1562
    %v1701 = vpop.f32.mrf.mxu0
    %v1702 = vadd.f32 %v1631, %v1701
    %v1703 = vpop.f32.mrf.mxu0
    %v1704 = vadd.f32 %v1633, %v1703
    %1705 = vdwg.mxu0
    %1706 = vmatprep.subr.mxu0 0.0
    %1707 = vmatpush1.msra.mxu0 %v275
    %1708 = vmatprep.subr.mxu0 0.0
    %1709 = vmatpush1.msra.mxu0 %v272
    %1710 = vmatprep.subr.mxu0 0.0
    %1711 = vmatpush1.msra.mxu0 %v269
    %1712 = vmatprep.subr.mxu0 0.0
    %1713 = vmatpush1.msra.mxu0 %v266
    %1714 = vmatprep.subr.mxu0 0.0
    %1715 = vmatpush1.msra.mxu0 %v263
    %1716 = vmatprep.subr.mxu0 0.0
    %1717 = vmatpush1.msra.mxu0 %v260
    %1718 = vmatprep.subr.mxu0 0.0
    %1719 = vmatpush1.msra.mxu0 %v257
    %1720 = vmatprep.subr.mxu0 0.0
    %1721 = vmatpush1.msra.mxu0 %v254
    %1722 = vmatprep.subr.mxu0 0.0
    %1723 = vmatpush1.msra.mxu0 %v251
    %1724 = vmatprep.subr.mxu0 0.0
    %1725 = vmatpush1.msra.mxu0 %v248
    %1726 = vmatprep.subr.mxu0 0.0
    %1727 = vmatpush1.msra.mxu0 %v245
    %1728 = vmatprep.subr.mxu0 0.0
    %1729 = vmatpush1.msra.mxu0 %v242
    %1730 = vmatprep.subr.mxu0 0.0
    %1731 = vmatpush1.msra.mxu0 %v239
    %1732 = vmatprep.subr.mxu0 0.0
    %1733 = vmatpush1.msra.mxu0 %v236
    %1734 = vmatprep.subr.mxu0 0.0
    %1735 = vmatpush1.msra.mxu0 %v233
    %1736 = vmatprep.subr.mxu0 0.0
    %1737 = vmatpush1.msra.mxu0 %v230
    %1738 = vmatprep.subr.mxu0 0.0
    %1739 = vmatpush2.msra.mxu0 %v323
    %1740 = vmatprep.subr.mxu0 0.0
    %1741 = vmatpush2.msra.mxu0 %v320
    %1742 = vmatprep.subr.mxu0 0.0
    %1743 = vmatpush2.msra.mxu0 %v317
    %1744 = vmatprep.subr.mxu0 0.0
    %1745 = vmatpush2.msra.mxu0 %v314
    %1746 = vmatprep.subr.mxu0 0.0
    %1747 = vmatpush2.msra.mxu0 %v311
    %1748 = vmatprep.subr.mxu0 0.0
    %1749 = vmatpush2.msra.mxu0 %v308
    %1750 = vmatprep.subr.mxu0 0.0
    %1751 = vmatpush2.msra.mxu0 %v305
    %1752 = vmatprep.subr.mxu0 0.0
    %1753 = vmatpush2.msra.mxu0 %v302
    %1754 = vmatprep.subr.mxu0 0.0
    %1755 = vmatpush2.msra.mxu0 %v299
    %1756 = vmatprep.subr.mxu0 0.0
    %1757 = vmatpush2.msra.mxu0 %v296
    %1758 = vmatprep.subr.mxu0 0.0
    %1759 = vmatpush2.msra.mxu0 %v293
    %1760 = vmatprep.subr.mxu0 0.0
    %1761 = vmatpush2.msra.mxu0 %v290
    %1762 = vmatprep.subr.mxu0 0.0
    %1763 = vmatpush2.msra.mxu0 %v287
    %1764 = vmatprep.subr.mxu0 0.0
    %1765 = vmatpush2.msra.mxu0 %v284
    %1766 = vmatprep.subr.mxu0 0.0
    %1767 = vmatpush2.msra.mxu0 %v281
    %1768 = vmatprep.subr.mxu0 0.0
    %1769 = vmatpush2.msra.mxu0 %v278
    %1770 = vmatprep.mubr.f32.mxu0 %v1558
    %1771 = vmatmul.mubr.f32.gmra.mxu0 %v1557
    %v1772 = vpop.f32.mrf.mxu0
    %v1773 = vadd.f32 0.0, %v1772
    %v1774 = vpop.f32.mrf.mxu0
    %1775 = vdwg.mxu0
    %1776 = vmatprep.subr.mxu0 0.0
    %1777 = vmatpush1.msra.mxu0 0.0
    %1778 = vmatprep.subr.mxu0 0.0
    %1779 = vmatpush1.msra.mxu0 0.0
    %1780 = vmatprep.subr.mxu0 0.0
    %1781 = vmatpush1.msra.mxu0 0.0
    %1782 = vmatprep.subr.mxu0 0.0
    %1783 = vmatpush1.msra.mxu0 0.0
    %1784 = vmatprep.subr.mxu0 0.0
    %1785 = vmatpush1.msra.mxu0 0.0
    %1786 = vmatprep.subr.mxu0 0.0
    %1787 = vmatpush1.msra.mxu0 0.0
    %1788 = vmatprep.subr.mxu0 0.0
    %1789 = vmatpush1.msra.mxu0 0.0
    %1790 = vmatprep.subr.mxu0 0.0
    %1791 = vmatpush1.msra.mxu0 0.0
    %1792 = vmatprep.subr.mxu0 0.0
    %1793 = vmatpush1.msra.mxu0 %v347
    %1794 = vmatprep.subr.mxu0 0.0
    %1795 = vmatpush1.msra.mxu0 %v344
    %1796 = vmatprep.subr.mxu0 0.0
    %1797 = vmatpush1.msra.mxu0 %v341
    %1798 = vmatprep.subr.mxu0 0.0
    %1799 = vmatpush1.msra.mxu0 %v338
    %1800 = vmatprep.subr.mxu0 0.0
    %1801 = vmatpush1.msra.mxu0 %v335
    %1802 = vmatprep.subr.mxu0 0.0
    %1803 = vmatpush1.msra.mxu0 %v332
    %1804 = vmatprep.subr.mxu0 0.0
    %1805 = vmatpush1.msra.mxu0 %v329
    %1806 = vmatprep.subr.mxu0 0.0
    %1807 = vmatpush1.msra.mxu0 %v326
    %1808 = vmatprep.subr.mxu0 0.0
    %1809 = vmatpush2.msra.mxu0 0.0
    %1810 = vmatprep.subr.mxu0 0.0
    %1811 = vmatpush2.msra.mxu0 0.0
    %1812 = vmatprep.subr.mxu0 0.0
    %1813 = vmatpush2.msra.mxu0 0.0
    %1814 = vmatprep.subr.mxu0 0.0
    %1815 = vmatpush2.msra.mxu0 0.0
    %1816 = vmatprep.subr.mxu0 0.0
    %1817 = vmatpush2.msra.mxu0 0.0
    %1818 = vmatprep.subr.mxu0 0.0
    %1819 = vmatpush2.msra.mxu0 0.0
    %1820 = vmatprep.subr.mxu0 0.0
    %1821 = vmatpush2.msra.mxu0 0.0
    %1822 = vmatprep.subr.mxu0 0.0
    %1823 = vmatpush2.msra.mxu0 0.0
    %1824 = vmatprep.subr.mxu0 0.0
    %1825 = vmatpush2.msra.mxu0 0.0
    %1826 = vmatprep.subr.mxu0 0.0
    %1827 = vmatpush2.msra.mxu0 0.0
    %1828 = vmatprep.subr.mxu0 0.0
    %1829 = vmatpush2.msra.mxu0 0.0
    %1830 = vmatprep.subr.mxu0 0.0
    %1831 = vmatpush2.msra.mxu0 0.0
    %1832 = vmatprep.subr.mxu0 0.0
    %1833 = vmatpush2.msra.mxu0 0.0
    %1834 = vmatprep.subr.mxu0 0.0
    %1835 = vmatpush2.msra.mxu0 0.0
    %1836 = vmatprep.subr.mxu0 0.0
    %1837 = vmatpush2.msra.mxu0 0.0
    %1838 = vmatprep.subr.mxu0 0.0
    %1839 = vmatpush2.msra.mxu0 0.0
    %1840 = vmatprep.mubr.f32.mxu0 0.0
    %1841 = vmatmul.mubr.f32.gmra.mxu0 %v1562
    %v1842 = vpop.f32.mrf.mxu0
    %v1843 = vadd.f32 %v1773, %v1842
    %v1844 = vpop.f32.mrf.mxu0
    %1845 = vdwg.mxu0
    %v1846 = vadd.f32 %v149, %v1702
    %v1847 = vadd.f32 %v151, %v1704
    %v1848 = vadd.f32 %v225, %v1843
    %v1849 = vtanh.pop %v1846
    %v1850 = vtanh.pop %v1847
    %v1851 = vtanh.pop %v1848
    %v1853 = vsel %vm348, %v1851, 0
    %1855 = vmatprep.subr.mxu0 %v274
    %1856 = vmatpush1.msra.mxu0 %v273
    %1857 = vmatprep.subr.mxu0 %v271
    %1858 = vmatpush1.msra.mxu0 %v270
    %1859 = vmatprep.subr.mxu0 %v268
    %1860 = vmatpush1.msra.mxu0 %v267
    %1861 = vmatprep.subr.mxu0 %v265
    %1862 = vmatpush1.msra.mxu0 %v264
    %1863 = vmatprep.subr.mxu0 %v262
    %1864 = vmatpush1.msra.mxu0 %v261
    %1865 = vmatprep.subr.mxu0 %v259
    %1866 = vmatpush1.msra.mxu0 %v258
    %1867 = vmatprep.subr.mxu0 %v256
    %1868 = vmatpush1.msra.mxu0 %v255
    %1869 = vmatprep.subr.mxu0 %v253
    %1870 = vmatpush1.msra.mxu0 %v252
    %1871 = vmatprep.subr.mxu0 %v250
    %1872 = vmatpush1.msra.mxu0 %v249
    %1873 = vmatprep.subr.mxu0 %v247
    %1874 = vmatpush1.msra.mxu0 %v246
    %1875 = vmatprep.subr.mxu0 %v244
    %1876 = vmatpush1.msra.mxu0 %v243
    %1877 = vmatprep.subr.mxu0 %v241
    %1878 = vmatpush1.msra.mxu0 %v240
    %1879 = vmatprep.subr.mxu0 %v238
    %1880 = vmatpush1.msra.mxu0 %v237
    %1881 = vmatprep.subr.mxu0 %v235
    %1882 = vmatpush1.msra.mxu0 %v234
    %1883 = vmatprep.subr.mxu0 %v232
    %1884 = vmatpush1.msra.mxu0 %v231
    %1885 = vmatprep.subr.mxu0 %v229
    %1886 = vmatpush1.msra.mxu0 %v228
    %1887 = vmatprep.subr.mxu0 %v322
    %1888 = vmatpush2.msra.mxu0 %v321
    %1889 = vmatprep.subr.mxu0 %v319
    %1890 = vmatpush2.msra.mxu0 %v318
    %1891 = vmatprep.subr.mxu0 %v316
    %1892 = vmatpush2.msra.mxu0 %v315
    %1893 = vmatprep.subr.mxu0 %v313
    %1894 = vmatpush2.msra.mxu0 %v312
    %1895 = vmatprep.subr.mxu0 %v310
    %1896 = vmatpush2.msra.mxu0 %v309
    %1897 = vmatprep.subr.mxu0 %v307
    %1898 = vmatpush2.msra.mxu0 %v306
    %1899 = vmatprep.subr.mxu0 %v304
    %1900 = vmatpush2.msra.mxu0 %v303
    %1901 = vmatprep.subr.mxu0 %v301
    %1902 = vmatpush2.msra.mxu0 %v300
    %1903 = vmatprep.subr.mxu0 %v298
    %1904 = vmatpush2.msra.mxu0 %v297
    %1905 = vmatprep.subr.mxu0 %v295
    %1906 = vmatpush2.msra.mxu0 %v294
    %1907 = vmatprep.subr.mxu0 %v292
    %1908 = vmatpush2.msra.mxu0 %v291
    %1909 = vmatprep.subr.mxu0 %v289
    %1910 = vmatpush2.msra.mxu0 %v288
    %1911 = vmatprep.subr.mxu0 %v286
    %1912 = vmatpush2.msra.mxu0 %v285
    %1913 = vmatprep.subr.mxu0 %v283
    %1914 = vmatpush2.msra.mxu0 %v282
    %1915 = vmatprep.subr.mxu0 %v280
    %1916 = vmatpush2.msra.mxu0 %v279
    %1917 = vmatprep.subr.mxu0 %v277
    %1918 = vmatpush2.msra.mxu0 %v276
    %1919 = vmatprep.mubr.f32.mxu0 %v1850
    %1920 = vmatmul.mubr.f32.gmra.mxu0 %v1849
    %v1921 = vpop.f32.mrf.mxu0
    %v1922 = vadd.f32 0.0, %v1921
    %v1923 = vpop.f32.mrf.mxu0
    %v1924 = vadd.f32 0.0, %v1923
    %1925 = vdwg.mxu0
    %1926 = vmatprep.subr.mxu0 0.0
    %1927 = vmatpush1.msra.mxu0 0.0
    %1928 = vmatprep.subr.mxu0 0.0
    %1929 = vmatpush1.msra.mxu0 0.0
    %1930 = vmatprep.subr.mxu0 0.0
    %1931 = vmatpush1.msra.mxu0 0.0
    %1932 = vmatprep.subr.mxu0 0.0
    %1933 = vmatpush1.msra.mxu0 0.0
    %1934 = vmatprep.subr.mxu0 0.0
    %1935 = vmatpush1.msra.mxu0 0.0
    %1936 = vmatprep.subr.mxu0 0.0
    %1937 = vmatpush1.msra.mxu0 0.0
    %1938 = vmatprep.subr.mxu0 0.0
    %1939 = vmatpush1.msra.mxu0 0.0
    %1940 = vmatprep.subr.mxu0 0.0
    %1941 = vmatpush1.msra.mxu0 0.0
    %1942 = vmatprep.subr.mxu0 %v346
    %1943 = vmatpush1.msra.mxu0 %v345
    %1944 = vmatprep.subr.mxu0 %v343
    %1945 = vmatpush1.msra.mxu0 %v342
    %1946 = vmatprep.subr.mxu0 %v340
    %1947 = vmatpush1.msra.mxu0 %v339
    %1948 = vmatprep.subr.mxu0 %v337
    %1949 = vmatpush1.msra.mxu0 %v336
    %1950 = vmatprep.subr.mxu0 %v334
    %1951 = vmatpush1.msra.mxu0 %v333
    %1952 = vmatprep.subr.mxu0 %v331
    %1953 = vmatpush1.msra.mxu0 %v330
    %1954 = vmatprep.subr.mxu0 %v328
    %1955 = vmatpush1.msra.mxu0 %v327
    %1956 = vmatprep.subr.mxu0 %v325
    %1957 = vmatpush1.msra.mxu0 %v324
    %1958 = vmatprep.subr.mxu0 0.0
    %1959 = vmatpush2.msra.mxu0 0.0
    %1960 = vmatprep.subr.mxu0 0.0
    %1961 = vmatpush2.msra.mxu0 0.0
    %1962 = vmatprep.subr.mxu0 0.0
    %1963 = vmatpush2.msra.mxu0 0.0
    %1964 = vmatprep.subr.mxu0 0.0
    %1965 = vmatpush2.msra.mxu0 0.0
    %1966 = vmatprep.subr.mxu0 0.0
    %1967 = vmatpush2.msra.mxu0 0.0
    %1968 = vmatprep.subr.mxu0 0.0
    %1969 = vmatpush2.msra.mxu0 0.0
    %1970 = vmatprep.subr.mxu0 0.0
    %1971 = vmatpush2.msra.mxu0 0.0
    %1972 = vmatprep.subr.mxu0 0.0
    %1973 = vmatpush2.msra.mxu0 0.0
    %1974 = vmatprep.subr.mxu0 0.0
    %1975 = vmatpush2.msra.mxu0 0.0
    %1976 = vmatprep.subr.mxu0 0.0
    %1977 = vmatpush2.msra.mxu0 0.0
    %1978 = vmatprep.subr.mxu0 0.0
    %1979 = vmatpush2.msra.mxu0 0.0
    %1980 = vmatprep.subr.mxu0 0.0
    %1981 = vmatpush2.msra.mxu0 0.0
    %1982 = vmatprep.subr.mxu0 0.0
    %1983 = vmatpush2.msra.mxu0 0.0
    %1984 = vmatprep.subr.mxu0 0.0
    %1985 = vmatpush2.msra.mxu0 0.0
    %1986 = vmatprep.subr.mxu0 0.0
    %1987 = vmatpush2.msra.mxu0 0.0
    %1988 = vmatprep.subr.mxu0 0.0
    %1989 = vmatpush2.msra.mxu0 0.0
    %1990 = vmatprep.mubr.f32.mxu0 0.0
    %1991 = vmatmul.mubr.f32.gmra.mxu0 %v1853
    %v1992 = vpop.f32.mrf.mxu0
    %v1993 = vadd.f32 %v1922, %v1992
    %v1994 = vpop.f32.mrf.mxu0
    %v1995 = vadd.f32 %v1924, %v1994
    %1996 = vdwg.mxu0
    %1997 = vmatprep.subr.mxu0 0.0
    %1998 = vmatpush1.msra.mxu0 %v275
    %1999 = vmatprep.subr.mxu0 0.0
    %2000 = vmatpush1.msra.mxu0 %v272
    %2001 = vmatprep.subr.mxu0 0.0
    %2002 = vmatpush1.msra.mxu0 %v269
    %2003 = vmatprep.subr.mxu0 0.0
    %2004 = vmatpush1.msra.mxu0 %v266
    %2005 = vmatprep.subr.mxu0 0.0
    %2006 = vmatpush1.msra.mxu0 %v263
    %2007 = vmatprep.subr.mxu0 0.0
    %2008 = vmatpush1.msra.mxu0 %v260
    %2009 = vmatprep.subr.mxu0 0.0
    %2010 = vmatpush1.msra.mxu0 %v257
    %2011 = vmatprep.subr.mxu0 0.0
    %2012 = vmatpush1.msra.mxu0 %v254
    %2013 = vmatprep.subr.mxu0 0.0
    %2014 = vmatpush1.msra.mxu0 %v251
    %2015 = vmatprep.subr.mxu0 0.0
    %2016 = vmatpush1.msra.mxu0 %v248
    %2017 = vmatprep.subr.mxu0 0.0
    %2018 = vmatpush1.msra.mxu0 %v245
    %2019 = vmatprep.subr.mxu0 0.0
    %2020 = vmatpush1.msra.mxu0 %v242
    %2021 = vmatprep.subr.mxu0 0.0
    %2022 = vmatpush1.msra.mxu0 %v239
    %2023 = vmatprep.subr.mxu0 0.0
    %2024 = vmatpush1.msra.mxu0 %v236
    %2025 = vmatprep.subr.mxu0 0.0
    %2026 = vmatpush1.msra.mxu0 %v233
    %2027 = vmatprep.subr.mxu0 0.0
    %2028 = vmatpush1.msra.mxu0 %v230
    %2029 = vmatprep.subr.mxu0 0.0
    %2030 = vmatpush2.msra.mxu0 %v323
    %2031 = vmatprep.subr.mxu0 0.0
    %2032 = vmatpush2.msra.mxu0 %v320
    %2033 = vmatprep.subr.mxu0 0.0
    %2034 = vmatpush2.msra.mxu0 %v317
    %2035 = vmatprep.subr.mxu0 0.0
    %2036 = vmatpush2.msra.mxu0 %v314
    %2037 = vmatprep.subr.mxu0 0.0
    %2038 = vmatpush2.msra.mxu0 %v311
    %2039 = vmatprep.subr.mxu0 0.0
    %2040 = vmatpush2.msra.mxu0 %v308
    %2041 = vmatprep.subr.mxu0 0.0
    %2042 = vmatpush2.msra.mxu0 %v305
    %2043 = vmatprep.subr.mxu0 0.0
    %2044 = vmatpush2.msra.mxu0 %v302
    %2045 = vmatprep.subr.mxu0 0.0
    %2046 = vmatpush2.msra.mxu0 %v299
    %2047 = vmatprep.subr.mxu0 0.0
    %2048 = vmatpush2.msra.mxu0 %v296
    %2049 = vmatprep.subr.mxu0 0.0
    %2050 = vmatpush2.msra.mxu0 %v293
    %2051 = vmatprep.subr.mxu0 0.0
    %2052 = vmatpush2.msra.mxu0 %v290
    %2053 = vmatprep.subr.mxu0 0.0
    %2054 = vmatpush2.msra.mxu0 %v287
    %2055 = vmatprep.subr.mxu0 0.0
    %2056 = vmatpush2.msra.mxu0 %v284
    %2057 = vmatprep.subr.mxu0 0.0
    %2058 = vmatpush2.msra.mxu0 %v281
    %2059 = vmatprep.subr.mxu0 0.0
    %2060 = vmatpush2.msra.mxu0 %v278
    %2061 = vmatprep.mubr.f32.mxu0 %v1850
    %2062 = vmatmul.mubr.f32.gmra.mxu0 %v1849
    %v2063 = vpop.f32.mrf.mxu0
    %v2064 = vadd.f32 0.0, %v2063
    %v2065 = vpop.f32.mrf.mxu0
    %2066 = vdwg.mxu0
    %2067 = vmatprep.subr.mxu0 0.0
    %2068 = vmatpush1.msra.mxu0 0.0
    %2069 = vmatprep.subr.mxu0 0.0
    %2070 = vmatpush1.msra.mxu0 0.0
    %2071 = vmatprep.subr.mxu0 0.0
    %2072 = vmatpush1.msra.mxu0 0.0
    %2073 = vmatprep.subr.mxu0 0.0
    %2074 = vmatpush1.msra.mxu0 0.0
    %2075 = vmatprep.subr.mxu0 0.0
    %2076 = vmatpush1.msra.mxu0 0.0
    %2077 = vmatprep.subr.mxu0 0.0
    %2078 = vmatpush1.msra.mxu0 0.0
    %2079 = vmatprep.subr.mxu0 0.0
    %2080 = vmatpush1.msra.mxu0 0.0
    %2081 = vmatprep.subr.mxu0 0.0
    %2082 = vmatpush1.msra.mxu0 0.0
    %2083 = vmatprep.subr.mxu0 0.0
    %2084 = vmatpush1.msra.mxu0 %v347
    %2085 = vmatprep.subr.mxu0 0.0
    %2086 = vmatpush1.msra.mxu0 %v344
    %2087 = vmatprep.subr.mxu0 0.0
    %2088 = vmatpush1.msra.mxu0 %v341
    %2089 = vmatprep.subr.mxu0 0.0
    %2090 = vmatpush1.msra.mxu0 %v338
    %2091 = vmatprep.subr.mxu0 0.0
    %2092 = vmatpush1.msra.mxu0 %v335
    %2093 = vmatprep.subr.mxu0 0.0
    %2094 = vmatpush1.msra.mxu0 %v332
    %2095 = vmatprep.subr.mxu0 0.0
    %2096 = vmatpush1.msra.mxu0 %v329
    %2097 = vmatprep.subr.mxu0 0.0
    %2098 = vmatpush1.msra.mxu0 %v326
    %2099 = vmatprep.subr.mxu0 0.0
    %2100 = vmatpush2.msra.mxu0 0.0
    %2101 = vmatprep.subr.mxu0 0.0
    %2102 = vmatpush2.msra.mxu0 0.0
    %2103 = vmatprep.subr.mxu0 0.0
    %2104 = vmatpush2.msra.mxu0 0.0
    %2105 = vmatprep.subr.mxu0 0.0
    %2106 = vmatpush2.msra.mxu0 0.0
    %2107 = vmatprep.subr.mxu0 0.0
    %2108 = vmatpush2.msra.mxu0 0.0
    %2109 = vmatprep.subr.mxu0 0.0
    %2110 = vmatpush2.msra.mxu0 0.0
    %2111 = vmatprep.subr.mxu0 0.0
    %2112 = vmatpush2.msra.mxu0 0.0
    %2113 = vmatprep.subr.mxu0 0.0
    %2114 = vmatpush2.msra.mxu0 0.0
    %2115 = vmatprep.subr.mxu0 0.0
    %2116 = vmatpush2.msra.mxu0 0.0
    %2117 = vmatprep.subr.mxu0 0.0
    %2118 = vmatpush2.msra.mxu0 0.0
    %2119 = vmatprep.subr.mxu0 0.0
    %2120 = vmatpush2.msra.mxu0 0.0
    %2121 = vmatprep.subr.mxu0 0.0
    %2122 = vmatpush2.msra.mxu0 0.0
    %2123 = vmatprep.subr.mxu0 0.0
    %2124 = vmatpush2.msra.mxu0 0.0
    %2125 = vmatprep.subr.mxu0 0.0
    %2126 = vmatpush2.msra.mxu0 0.0
    %2127 = vmatprep.subr.mxu0 0.0
    %2128 = vmatpush2.msra.mxu0 0.0
    %2129 = vmatprep.subr.mxu0 0.0
    %2130 = vmatpush2.msra.mxu0 0.0
    %2131 = vmatprep.mubr.f32.mxu0 0.0
    %2132 = vmatmul.mubr.f32.gmra.mxu0 %v1853
    %v2133 = vpop.f32.mrf.mxu0
    %v2134 = vadd.f32 %v2064, %v2133
    %v2135 = vpop.f32.mrf.mxu0
    %2136 = vdwg.mxu0
    %v2140 = vrot.slane %v1993, 6
    %v2141 = vrot.slane %v1995, 6
    %v2142 = vrot.slane %v2134, 6
    %v2146 = vadd.f32 %v149, %v2140
    %v2147 = vadd.f32 %v151, %v2141
    %v2148 = vadd.f32 %v225, %v2142
    %v2149 = vtanh.pop %v2146
    %v2150 = vtanh.pop %v2147
    %v2151 = vtanh.pop %v2148
    %v2155 = vrot.slane %v2149, 2
    %v2156 = vrot.slane %v2150, 2
    %v2157 = vrot.slane %v2151, 2
    %v2160 = vsel %vm348, %v2157, 0
    %2162 = vmatprep.subr.mxu0 %v274
    %2163 = vmatpush1.msra.mxu0 %v273
    %2164 = vmatprep.subr.mxu0 %v271
    %2165 = vmatpush1.msra.mxu0 %v270
    %2166 = vmatprep.subr.mxu0 %v268
    %2167 = vmatpush1.msra.mxu0 %v267
    %2168 = vmatprep.subr.mxu0 %v265
    %2169 = vmatpush1.msra.mxu0 %v264
    %2170 = vmatprep.subr.mxu0 %v262
    %2171 = vmatpush1.msra.mxu0 %v261
    %2172 = vmatprep.subr.mxu0 %v259
    %2173 = vmatpush1.msra.mxu0 %v258
    %2174 = vmatprep.subr.mxu0 %v256
    %2175 = vmatpush1.msra.mxu0 %v255
    %2176 = vmatprep.subr.mxu0 %v253
    %2177 = vmatpush1.msra.mxu0 %v252
    %2178 = vmatprep.subr.mxu0 %v250
    %2179 = vmatpush1.msra.mxu0 %v249
    %2180 = vmatprep.subr.mxu0 %v247
    %2181 = vmatpush1.msra.mxu0 %v246
    %2182 = vmatprep.subr.mxu0 %v244
    %2183 = vmatpush1.msra.mxu0 %v243
    %2184 = vmatprep.subr.mxu0 %v241
    %2185 = vmatpush1.msra.mxu0 %v240
    %2186 = vmatprep.subr.mxu0 %v238
    %2187 = vmatpush1.msra.mxu0 %v237
    %2188 = vmatprep.subr.mxu0 %v235
    %2189 = vmatpush1.msra.mxu0 %v234
    %2190 = vmatprep.subr.mxu0 %v232
    %2191 = vmatpush1.msra.mxu0 %v231
    %2192 = vmatprep.subr.mxu0 %v229
    %2193 = vmatpush1.msra.mxu0 %v228
    %2194 = vmatprep.subr.mxu0 %v322
    %2195 = vmatpush2.msra.mxu0 %v321
    %2196 = vmatprep.subr.mxu0 %v319
    %2197 = vmatpush2.msra.mxu0 %v318
    %2198 = vmatprep.subr.mxu0 %v316
    %2199 = vmatpush2.msra.mxu0 %v315
    %2200 = vmatprep.subr.mxu0 %v313
    %2201 = vmatpush2.msra.mxu0 %v312
    %2202 = vmatprep.subr.mxu0 %v310
    %2203 = vmatpush2.msra.mxu0 %v309
    %2204 = vmatprep.subr.mxu0 %v307
    %2205 = vmatpush2.msra.mxu0 %v306
    %2206 = vmatprep.subr.mxu0 %v304
    %2207 = vmatpush2.msra.mxu0 %v303
    %2208 = vmatprep.subr.mxu0 %v301
    %2209 = vmatpush2.msra.mxu0 %v300
    %2210 = vmatprep.subr.mxu0 %v298
    %2211 = vmatpush2.msra.mxu0 %v297
    %2212 = vmatprep.subr.mxu0 %v295
    %2213 = vmatpush2.msra.mxu0 %v294
    %2214 = vmatprep.subr.mxu0 %v292
    %2215 = vmatpush2.msra.mxu0 %v291
    %2216 = vmatprep.subr.mxu0 %v289
    %2217 = vmatpush2.msra.mxu0 %v288
    %2218 = vmatprep.subr.mxu0 %v286
    %2219 = vmatpush2.msra.mxu0 %v285
    %2220 = vmatprep.subr.mxu0 %v283
    %2221 = vmatpush2.msra.mxu0 %v282
    %2222 = vmatprep.subr.mxu0 %v280
    %2223 = vmatpush2.msra.mxu0 %v279
    %2224 = vmatprep.subr.mxu0 %v277
    %2225 = vmatpush2.msra.mxu0 %v276
    %2226 = vmatprep.mubr.f32.mxu0 %v2156
    %2227 = vmatmul.mubr.f32.gmra.mxu0 %v2155
    %v2228 = vpop.f32.mrf.mxu0
    %v2229 = vadd.f32 0.0, %v2228
    %v2230 = vpop.f32.mrf.mxu0
    %v2231 = vadd.f32 0.0, %v2230
    %2232 = vdwg.mxu0
    %2233 = vmatprep.subr.mxu0 0.0
    %2234 = vmatpush1.msra.mxu0 0.0
    %2235 = vmatprep.subr.mxu0 0.0
    %2236 = vmatpush1.msra.mxu0 0.0
    %2237 = vmatprep.subr.mxu0 0.0
    %2238 = vmatpush1.msra.mxu0 0.0
    %2239 = vmatprep.subr.mxu0 0.0
    %2240 = vmatpush1.msra.mxu0 0.0
    %2241 = vmatprep.subr.mxu0 0.0
    %2242 = vmatpush1.msra.mxu0 0.0
    %2243 = vmatprep.subr.mxu0 0.0
    %2244 = vmatpush1.msra.mxu0 0.0
    %2245 = vmatprep.subr.mxu0 0.0
    %2246 = vmatpush1.msra.mxu0 0.0
    %2247 = vmatprep.subr.mxu0 0.0
    %2248 = vmatpush1.msra.mxu0 0.0
    %2249 = vmatprep.subr.mxu0 %v346
    %2250 = vmatpush1.msra.mxu0 %v345
    %2251 = vmatprep.subr.mxu0 %v343
    %2252 = vmatpush1.msra.mxu0 %v342
    %2253 = vmatprep.subr.mxu0 %v340
    %2254 = vmatpush1.msra.mxu0 %v339
    %2255 = vmatprep.subr.mxu0 %v337
    %2256 = vmatpush1.msra.mxu0 %v336
    %2257 = vmatprep.subr.mxu0 %v334
    %2258 = vmatpush1.msra.mxu0 %v333
    %2259 = vmatprep.subr.mxu0 %v331
    %2260 = vmatpush1.msra.mxu0 %v330
    %2261 = vmatprep.subr.mxu0 %v328
    %2262 = vmatpush1.msra.mxu0 %v327
    %2263 = vmatprep.subr.mxu0 %v325
    %2264 = vmatpush1.msra.mxu0 %v324
    %2265 = vmatprep.subr.mxu0 0.0
    %2266 = vmatpush2.msra.mxu0 0.0
    %2267 = vmatprep.subr.mxu0 0.0
    %2268 = vmatpush2.msra.mxu0 0.0
    %2269 = vmatprep.subr.mxu0 0.0
    %2270 = vmatpush2.msra.mxu0 0.0
    %2271 = vmatprep.subr.mxu0 0.0
    %2272 = vmatpush2.msra.mxu0 0.0
    %2273 = vmatprep.subr.mxu0 0.0
    %2274 = vmatpush2.msra.mxu0 0.0
    %2275 = vmatprep.subr.mxu0 0.0
    %2276 = vmatpush2.msra.mxu0 0.0
    %2277 = vmatprep.subr.mxu0 0.0
    %2278 = vmatpush2.msra.mxu0 0.0
    %2279 = vmatprep.subr.mxu0 0.0
    %2280 = vmatpush2.msra.mxu0 0.0
    %2281 = vmatprep.subr.mxu0 0.0
    %2282 = vmatpush2.msra.mxu0 0.0
    %2283 = vmatprep.subr.mxu0 0.0
    %2284 = vmatpush2.msra.mxu0 0.0
    %2285 = vmatprep.subr.mxu0 0.0
    %2286 = vmatpush2.msra.mxu0 0.0
    %2287 = vmatprep.subr.mxu0 0.0
    %2288 = vmatpush2.msra.mxu0 0.0
    %2289 = vmatprep.subr.mxu0 0.0
    %2290 = vmatpush2.msra.mxu0 0.0
    %2291 = vmatprep.subr.mxu0 0.0
    %2292 = vmatpush2.msra.mxu0 0.0
    %2293 = vmatprep.subr.mxu0 0.0
    %2294 = vmatpush2.msra.mxu0 0.0
    %2295 = vmatprep.subr.mxu0 0.0
    %2296 = vmatpush2.msra.mxu0 0.0
    %2297 = vmatprep.mubr.f32.mxu0 0.0
    %2298 = vmatmul.mubr.f32.gmra.mxu0 %v2160
    %v2299 = vpop.f32.mrf.mxu0
    %v2300 = vadd.f32 %v2229, %v2299
    %v2301 = vpop.f32.mrf.mxu0
    %v2302 = vadd.f32 %v2231, %v2301
    %2303 = vdwg.mxu0
    %2304 = vmatprep.subr.mxu0 0.0
    %2305 = vmatpush1.msra.mxu0 %v275
    %2306 = vmatprep.subr.mxu0 0.0
    %2307 = vmatpush1.msra.mxu0 %v272
    %2308 = vmatprep.subr.mxu0 0.0
    %2309 = vmatpush1.msra.mxu0 %v269
    %2310 = vmatprep.subr.mxu0 0.0
    %2311 = vmatpush1.msra.mxu0 %v266
    %2312 = vmatprep.subr.mxu0 0.0
    %2313 = vmatpush1.msra.mxu0 %v263
    %2314 = vmatprep.subr.mxu0 0.0
    %2315 = vmatpush1.msra.mxu0 %v260
    %2316 = vmatprep.subr.mxu0 0.0
    %2317 = vmatpush1.msra.mxu0 %v257
    %2318 = vmatprep.subr.mxu0 0.0
    %2319 = vmatpush1.msra.mxu0 %v254
    %2320 = vmatprep.subr.mxu0 0.0
    %2321 = vmatpush1.msra.mxu0 %v251
    %2322 = vmatprep.subr.mxu0 0.0
    %2323 = vmatpush1.msra.mxu0 %v248
    %2324 = vmatprep.subr.mxu0 0.0
    %2325 = vmatpush1.msra.mxu0 %v245
    %2326 = vmatprep.subr.mxu0 0.0
    %2327 = vmatpush1.msra.mxu0 %v242
    %2328 = vmatprep.subr.mxu0 0.0
    %2329 = vmatpush1.msra.mxu0 %v239
    %2330 = vmatprep.subr.mxu0 0.0
    %2331 = vmatpush1.msra.mxu0 %v236
    %2332 = vmatprep.subr.mxu0 0.0
    %2333 = vmatpush1.msra.mxu0 %v233
    %2334 = vmatprep.subr.mxu0 0.0
    %2335 = vmatpush1.msra.mxu0 %v230
    %2336 = vmatprep.subr.mxu0 0.0
    %2337 = vmatpush2.msra.mxu0 %v323
    %2338 = vmatprep.subr.mxu0 0.0
    %2339 = vmatpush2.msra.mxu0 %v320
    %2340 = vmatprep.subr.mxu0 0.0
    %2341 = vmatpush2.msra.mxu0 %v317
    %2342 = vmatprep.subr.mxu0 0.0
    %2343 = vmatpush2.msra.mxu0 %v314
    %2344 = vmatprep.subr.mxu0 0.0
    %2345 = vmatpush2.msra.mxu0 %v311
    %2346 = vmatprep.subr.mxu0 0.0
    %2347 = vmatpush2.msra.mxu0 %v308
    %2348 = vmatprep.subr.mxu0 0.0
    %2349 = vmatpush2.msra.mxu0 %v305
    %2350 = vmatprep.subr.mxu0 0.0
    %2351 = vmatpush2.msra.mxu0 %v302
    %2352 = vmatprep.subr.mxu0 0.0
    %2353 = vmatpush2.msra.mxu0 %v299
    %2354 = vmatprep.subr.mxu0 0.0
    %2355 = vmatpush2.msra.mxu0 %v296
    %2356 = vmatprep.subr.mxu0 0.0
    %2357 = vmatpush2.msra.mxu0 %v293
    %2358 = vmatprep.subr.mxu0 0.0
    %2359 = vmatpush2.msra.mxu0 %v290
    %2360 = vmatprep.subr.mxu0 0.0
    %2361 = vmatpush2.msra.mxu0 %v287
    %2362 = vmatprep.subr.mxu0 0.0
    %2363 = vmatpush2.msra.mxu0 %v284
    %2364 = vmatprep.subr.mxu0 0.0
    %2365 = vmatpush2.msra.mxu0 %v281
    %2366 = vmatprep.subr.mxu0 0.0
    %2367 = vmatpush2.msra.mxu0 %v278
    %2368 = vmatprep.mubr.f32.mxu0 %v2156
    %2369 = vmatmul.mubr.f32.gmra.mxu0 %v2155
    %v2370 = vpop.f32.mrf.mxu0
    %v2371 = vadd.f32 0.0, %v2370
    %v2372 = vpop.f32.mrf.mxu0
    %2373 = vdwg.mxu0
    %2374 = vmatprep.subr.mxu0 0.0
    %2375 = vmatpush1.msra.mxu0 0.0
    %2376 = vmatprep.subr.mxu0 0.0
    %2377 = vmatpush1.msra.mxu0 0.0
    %2378 = vmatprep.subr.mxu0 0.0
    %2379 = vmatpush1.msra.mxu0 0.0
    %2380 = vmatprep.subr.mxu0 0.0
    %2381 = vmatpush1.msra.mxu0 0.0
    %2382 = vmatprep.subr.mxu0 0.0
    %2383 = vmatpush1.msra.mxu0 0.0
    %2384 = vmatprep.subr.mxu0 0.0
    %2385 = vmatpush1.msra.mxu0 0.0
    %2386 = vmatprep.subr.mxu0 0.0
    %2387 = vmatpush1.msra.mxu0 0.0
    %2388 = vmatprep.subr.mxu0 0.0
    %2389 = vmatpush1.msra.mxu0 0.0
    %2390 = vmatprep.subr.mxu0 0.0
    %2391 = vmatpush1.msra.mxu0 %v347
    %2392 = vmatprep.subr.mxu0 0.0
    %2393 = vmatpush1.msra.mxu0 %v344
    %2394 = vmatprep.subr.mxu0 0.0
    %2395 = vmatpush1.msra.mxu0 %v341
    %2396 = vmatprep.subr.mxu0 0.0
    %2397 = vmatpush1.msra.mxu0 %v338
    %2398 = vmatprep.subr.mxu0 0.0
    %2399 = vmatpush1.msra.mxu0 %v335
    %2400 = vmatprep.subr.mxu0 0.0
    %2401 = vmatpush1.msra.mxu0 %v332
    %2402 = vmatprep.subr.mxu0 0.0
    %2403 = vmatpush1.msra.mxu0 %v329
    %2404 = vmatprep.subr.mxu0 0.0
    %2405 = vmatpush1.msra.mxu0 %v326
    %2406 = vmatprep.subr.mxu0 0.0
    %2407 = vmatpush2.msra.mxu0 0.0
    %2408 = vmatprep.subr.mxu0 0.0
    %2409 = vmatpush2.msra.mxu0 0.0
    %2410 = vmatprep.subr.mxu0 0.0
    %2411 = vmatpush2.msra.mxu0 0.0
    %2412 = vmatprep.subr.mxu0 0.0
    %2413 = vmatpush2.msra.mxu0 0.0
    %2414 = vmatprep.subr.mxu0 0.0
    %2415 = vmatpush2.msra.mxu0 0.0
    %2416 = vmatprep.subr.mxu0 0.0
    %2417 = vmatpush2.msra.mxu0 0.0
    %2418 = vmatprep.subr.mxu0 0.0
    %2419 = vmatpush2.msra.mxu0 0.0
    %2420 = vmatprep.subr.mxu0 0.0
    %2421 = vmatpush2.msra.mxu0 0.0
    %2422 = vmatprep.subr.mxu0 0.0
    %2423 = vmatpush2.msra.mxu0 0.0
    %2424 = vmatprep.subr.mxu0 0.0
    %2425 = vmatpush2.msra.mxu0 0.0
    %2426 = vmatprep.subr.mxu0 0.0
    %2427 = vmatpush2.msra.mxu0 0.0
    %2428 = vmatprep.subr.mxu0 0.0
    %2429 = vmatpush2.msra.mxu0 0.0
    %2430 = vmatprep.subr.mxu0 0.0
    %2431 = vmatpush2.msra.mxu0 0.0
    %2432 = vmatprep.subr.mxu0 0.0
    %2433 = vmatpush2.msra.mxu0 0.0
    %2434 = vmatprep.subr.mxu0 0.0
    %2435 = vmatpush2.msra.mxu0 0.0
    %2436 = vmatprep.subr.mxu0 0.0
    %2437 = vmatpush2.msra.mxu0 0.0
    %2438 = vmatprep.mubr.f32.mxu0 0.0
    %2439 = vmatmul.mubr.f32.gmra.mxu0 %v2160
    %v2440 = vpop.f32.mrf.mxu0
    %v2441 = vadd.f32 %v2371, %v2440
    %v2442 = vpop.f32.mrf.mxu0
    %2443 = vdwg.mxu0
    %v2447 = vrot.slane %v2300, 4
    %v2448 = vrot.slane %v2302, 4
    %v2449 = vrot.slane %v2441, 4
    %v2453 = vadd.f32 %v149, %v2447
    %v2454 = vadd.f32 %v151, %v2448
    %v2455 = vadd.f32 %v225, %v2449
    %v2456 = vtanh.pop %v2453
    %v2457 = vtanh.pop %v2454
    %v2458 = vtanh.pop %v2455
    %v2462 = vrot.slane %v2456, 4
    %v2463 = vrot.slane %v2457, 4
    %v2464 = vrot.slane %v2458, 4
    %v2467 = vsel %vm348, %v2464, 0
    %2469 = vmatprep.subr.mxu0 %v274
    %2470 = vmatpush1.msra.mxu0 %v273
    %2471 = vmatprep.subr.mxu0 %v271
    %2472 = vmatpush1.msra.mxu0 %v270
    %2473 = vmatprep.subr.mxu0 %v268
    %2474 = vmatpush1.msra.mxu0 %v267
    %2475 = vmatprep.subr.mxu0 %v265
    %2476 = vmatpush1.msra.mxu0 %v264
    %2477 = vmatprep.subr.mxu0 %v262
    %2478 = vmatpush1.msra.mxu0 %v261
    %2479 = vmatprep.subr.mxu0 %v259
    %2480 = vmatpush1.msra.mxu0 %v258
    %2481 = vmatprep.subr.mxu0 %v256
    %2482 = vmatpush1.msra.mxu0 %v255
    %2483 = vmatprep.subr.mxu0 %v253
    %2484 = vmatpush1.msra.mxu0 %v252
    %2485 = vmatprep.subr.mxu0 %v250
    %2486 = vmatpush1.msra.mxu0 %v249
    %2487 = vmatprep.subr.mxu0 %v247
    %2488 = vmatpush1.msra.mxu0 %v246
    %2489 = vmatprep.subr.mxu0 %v244
    %2490 = vmatpush1.msra.mxu0 %v243
    %2491 = vmatprep.subr.mxu0 %v241
    %2492 = vmatpush1.msra.mxu0 %v240
    %2493 = vmatprep.subr.mxu0 %v238
    %2494 = vmatpush1.msra.mxu0 %v237
    %2495 = vmatprep.subr.mxu0 %v235
    %2496 = vmatpush1.msra.mxu0 %v234
    %2497 = vmatprep.subr.mxu0 %v232
    %2498 = vmatpush1.msra.mxu0 %v231
    %2499 = vmatprep.subr.mxu0 %v229
    %2500 = vmatpush1.msra.mxu0 %v228
    %2501 = vmatprep.subr.mxu0 %v322
    %2502 = vmatpush2.msra.mxu0 %v321
    %2503 = vmatprep.subr.mxu0 %v319
    %2504 = vmatpush2.msra.mxu0 %v318
    %2505 = vmatprep.subr.mxu0 %v316
    %2506 = vmatpush2.msra.mxu0 %v315
    %2507 = vmatprep.subr.mxu0 %v313
    %2508 = vmatpush2.msra.mxu0 %v312
    %2509 = vmatprep.subr.mxu0 %v310
    %2510 = vmatpush2.msra.mxu0 %v309
    %2511 = vmatprep.subr.mxu0 %v307
    %2512 = vmatpush2.msra.mxu0 %v306
    %2513 = vmatprep.subr.mxu0 %v304
    %2514 = vmatpush2.msra.mxu0 %v303
    %2515 = vmatprep.subr.mxu0 %v301
    %2516 = vmatpush2.msra.mxu0 %v300
    %2517 = vmatprep.subr.mxu0 %v298
    %2518 = vmatpush2.msra.mxu0 %v297
    %2519 = vmatprep.subr.mxu0 %v295
    %2520 = vmatpush2.msra.mxu0 %v294
    %2521 = vmatprep.subr.mxu0 %v292
    %2522 = vmatpush2.msra.mxu0 %v291
    %2523 = vmatprep.subr.mxu0 %v289
    %2524 = vmatpush2.msra.mxu0 %v288
    %2525 = vmatprep.subr.mxu0 %v286
    %2526 = vmatpush2.msra.mxu0 %v285
    %2527 = vmatprep.subr.mxu0 %v283
    %2528 = vmatpush2.msra.mxu0 %v282
    %2529 = vmatprep.subr.mxu0 %v280
    %2530 = vmatpush2.msra.mxu0 %v279
    %2531 = vmatprep.subr.mxu0 %v277
    %2532 = vmatpush2.msra.mxu0 %v276
    %2533 = vmatprep.mubr.f32.mxu0 %v2463
    %2534 = vmatmul.mubr.f32.gmra.mxu0 %v2462
    %v2535 = vpop.f32.mrf.mxu0
    %v2536 = vadd.f32 0.0, %v2535
    %v2537 = vpop.f32.mrf.mxu0
    %v2538 = vadd.f32 0.0, %v2537
    %2539 = vdwg.mxu0
    %2540 = vmatprep.subr.mxu0 0.0
    %2541 = vmatpush1.msra.mxu0 0.0
    %2542 = vmatprep.subr.mxu0 0.0
    %2543 = vmatpush1.msra.mxu0 0.0
    %2544 = vmatprep.subr.mxu0 0.0
    %2545 = vmatpush1.msra.mxu0 0.0
    %2546 = vmatprep.subr.mxu0 0.0
    %2547 = vmatpush1.msra.mxu0 0.0
    %2548 = vmatprep.subr.mxu0 0.0
    %2549 = vmatpush1.msra.mxu0 0.0
    %2550 = vmatprep.subr.mxu0 0.0
    %2551 = vmatpush1.msra.mxu0 0.0
    %2552 = vmatprep.subr.mxu0 0.0
    %2553 = vmatpush1.msra.mxu0 0.0
    %2554 = vmatprep.subr.mxu0 0.0
    %2555 = vmatpush1.msra.mxu0 0.0
    %2556 = vmatprep.subr.mxu0 %v346
    %2557 = vmatpush1.msra.mxu0 %v345
    %2558 = vmatprep.subr.mxu0 %v343
    %2559 = vmatpush1.msra.mxu0 %v342
    %2560 = vmatprep.subr.mxu0 %v340
    %2561 = vmatpush1.msra.mxu0 %v339
    %2562 = vmatprep.subr.mxu0 %v337
    %2563 = vmatpush1.msra.mxu0 %v336
    %2564 = vmatprep.subr.mxu0 %v334
    %2565 = vmatpush1.msra.mxu0 %v333
    %2566 = vmatprep.subr.mxu0 %v331
    %2567 = vmatpush1.msra.mxu0 %v330
    %2568 = vmatprep.subr.mxu0 %v328
    %2569 = vmatpush1.msra.mxu0 %v327
    %2570 = vmatprep.subr.mxu0 %v325
    %2571 = vmatpush1.msra.mxu0 %v324
    %2572 = vmatprep.subr.mxu0 0.0
    %2573 = vmatpush2.msra.mxu0 0.0
    %2574 = vmatprep.subr.mxu0 0.0
    %2575 = vmatpush2.msra.mxu0 0.0
    %2576 = vmatprep.subr.mxu0 0.0
    %2577 = vmatpush2.msra.mxu0 0.0
    %2578 = vmatprep.subr.mxu0 0.0
    %2579 = vmatpush2.msra.mxu0 0.0
    %2580 = vmatprep.subr.mxu0 0.0
    %2581 = vmatpush2.msra.mxu0 0.0
    %2582 = vmatprep.subr.mxu0 0.0
    %2583 = vmatpush2.msra.mxu0 0.0
    %2584 = vmatprep.subr.mxu0 0.0
    %2585 = vmatpush2.msra.mxu0 0.0
    %2586 = vmatprep.subr.mxu0 0.0
    %2587 = vmatpush2.msra.mxu0 0.0
    %2588 = vmatprep.subr.mxu0 0.0
    %2589 = vmatpush2.msra.mxu0 0.0
    %2590 = vmatprep.subr.mxu0 0.0
    %2591 = vmatpush2.msra.mxu0 0.0
    %2592 = vmatprep.subr.mxu0 0.0
    %2593 = vmatpush2.msra.mxu0 0.0
    %2594 = vmatprep.subr.mxu0 0.0
    %2595 = vmatpush2.msra.mxu0 0.0
    %2596 = vmatprep.subr.mxu0 0.0
    %2597 = vmatpush2.msra.mxu0 0.0
    %2598 = vmatprep.subr.mxu0 0.0
    %2599 = vmatpush2.msra.mxu0 0.0
    %2600 = vmatprep.subr.mxu0 0.0
    %2601 = vmatpush2.msra.mxu0 0.0
    %2602 = vmatprep.subr.mxu0 0.0
    %2603 = vmatpush2.msra.mxu0 0.0
    %2604 = vmatprep.mubr.f32.mxu0 0.0
    %2605 = vmatmul.mubr.f32.gmra.mxu0 %v2467
    %v2606 = vpop.f32.mrf.mxu0
    %v2607 = vadd.f32 %v2536, %v2606
    %v2608 = vpop.f32.mrf.mxu0
    %v2609 = vadd.f32 %v2538, %v2608
    %2610 = vdwg.mxu0
    %2611 = vmatprep.subr.mxu0 0.0
    %2612 = vmatpush1.msra.mxu0 %v275
    %2613 = vmatprep.subr.mxu0 0.0
    %2614 = vmatpush1.msra.mxu0 %v272
    %2615 = vmatprep.subr.mxu0 0.0
    %2616 = vmatpush1.msra.mxu0 %v269
    %2617 = vmatprep.subr.mxu0 0.0
    %2618 = vmatpush1.msra.mxu0 %v266
    %2619 = vmatprep.subr.mxu0 0.0
    %2620 = vmatpush1.msra.mxu0 %v263
    %2621 = vmatprep.subr.mxu0 0.0
    %2622 = vmatpush1.msra.mxu0 %v260
    %2623 = vmatprep.subr.mxu0 0.0
    %2624 = vmatpush1.msra.mxu0 %v257
    %2625 = vmatprep.subr.mxu0 0.0
    %2626 = vmatpush1.msra.mxu0 %v254
    %2627 = vmatprep.subr.mxu0 0.0
    %2628 = vmatpush1.msra.mxu0 %v251
    %2629 = vmatprep.subr.mxu0 0.0
    %2630 = vmatpush1.msra.mxu0 %v248
    %2631 = vmatprep.subr.mxu0 0.0
    %2632 = vmatpush1.msra.mxu0 %v245
    %2633 = vmatprep.subr.mxu0 0.0
    %2634 = vmatpush1.msra.mxu0 %v242
    %2635 = vmatprep.subr.mxu0 0.0
    %2636 = vmatpush1.msra.mxu0 %v239
    %2637 = vmatprep.subr.mxu0 0.0
    %2638 = vmatpush1.msra.mxu0 %v236
    %2639 = vmatprep.subr.mxu0 0.0
    %2640 = vmatpush1.msra.mxu0 %v233
    %2641 = vmatprep.subr.mxu0 0.0
    %2642 = vmatpush1.msra.mxu0 %v230
    %2643 = vmatprep.subr.mxu0 0.0
    %2644 = vmatpush2.msra.mxu0 %v323
    %2645 = vmatprep.subr.mxu0 0.0
    %2646 = vmatpush2.msra.mxu0 %v320
    %2647 = vmatprep.subr.mxu0 0.0
    %2648 = vmatpush2.msra.mxu0 %v317
    %2649 = vmatprep.subr.mxu0 0.0
    %2650 = vmatpush2.msra.mxu0 %v314
    %2651 = vmatprep.subr.mxu0 0.0
    %2652 = vmatpush2.msra.mxu0 %v311
    %2653 = vmatprep.subr.mxu0 0.0
    %2654 = vmatpush2.msra.mxu0 %v308
    %2655 = vmatprep.subr.mxu0 0.0
    %2656 = vmatpush2.msra.mxu0 %v305
    %2657 = vmatprep.subr.mxu0 0.0
    %2658 = vmatpush2.msra.mxu0 %v302
    %2659 = vmatprep.subr.mxu0 0.0
    %2660 = vmatpush2.msra.mxu0 %v299
    %2661 = vmatprep.subr.mxu0 0.0
    %2662 = vmatpush2.msra.mxu0 %v296
    %2663 = vmatprep.subr.mxu0 0.0
    %2664 = vmatpush2.msra.mxu0 %v293
    %2665 = vmatprep.subr.mxu0 0.0
    %2666 = vmatpush2.msra.mxu0 %v290
    %2667 = vmatprep.subr.mxu0 0.0
    %2668 = vmatpush2.msra.mxu0 %v287
    %2669 = vmatprep.subr.mxu0 0.0
    %2670 = vmatpush2.msra.mxu0 %v284
    %2671 = vmatprep.subr.mxu0 0.0
    %2672 = vmatpush2.msra.mxu0 %v281
    %2673 = vmatprep.subr.mxu0 0.0
    %2674 = vmatpush2.msra.mxu0 %v278
    %2675 = vmatprep.mubr.f32.mxu0 %v2463
    %2676 = vmatmul.mubr.f32.gmra.mxu0 %v2462
    %v2677 = vpop.f32.mrf.mxu0
    %v2678 = vadd.f32 0.0, %v2677
    %v2679 = vpop.f32.mrf.mxu0
    %2680 = vdwg.mxu0
    %2681 = vmatprep.subr.mxu0 0.0
    %2682 = vmatpush1.msra.mxu0 0.0
    %2683 = vmatprep.subr.mxu0 0.0
    %2684 = vmatpush1.msra.mxu0 0.0
    %2685 = vmatprep.subr.mxu0 0.0
    %2686 = vmatpush1.msra.mxu0 0.0
    %2687 = vmatprep.subr.mxu0 0.0
    %2688 = vmatpush1.msra.mxu0 0.0
    %2689 = vmatprep.subr.mxu0 0.0
    %2690 = vmatpush1.msra.mxu0 0.0
    %2691 = vmatprep.subr.mxu0 0.0
    %2692 = vmatpush1.msra.mxu0 0.0
    %2693 = vmatprep.subr.mxu0 0.0
    %2694 = vmatpush1.msra.mxu0 0.0
    %2695 = vmatprep.subr.mxu0 0.0
    %2696 = vmatpush1.msra.mxu0 0.0
    %2697 = vmatprep.subr.mxu0 0.0
    %2698 = vmatpush1.msra.mxu0 %v347
    %2699 = vmatprep.subr.mxu0 0.0
    %2700 = vmatpush1.msra.mxu0 %v344
    %2701 = vmatprep.subr.mxu0 0.0
    %2702 = vmatpush1.msra.mxu0 %v341
    %2703 = vmatprep.subr.mxu0 0.0
    %2704 = vmatpush1.msra.mxu0 %v338
    %2705 = vmatprep.subr.mxu0 0.0
    %2706 = vmatpush1.msra.mxu0 %v335
    %2707 = vmatprep.subr.mxu0 0.0
    %2708 = vmatpush1.msra.mxu0 %v332
    %2709 = vmatprep.subr.mxu0 0.0
    %2710 = vmatpush1.msra.mxu0 %v329
    %2711 = vmatprep.subr.mxu0 0.0
    %2712 = vmatpush1.msra.mxu0 %v326
    %2713 = vmatprep.subr.mxu0 0.0
    %2714 = vmatpush2.msra.mxu0 0.0
    %2715 = vmatprep.subr.mxu0 0.0
    %2716 = vmatpush2.msra.mxu0 0.0
    %2717 = vmatprep.subr.mxu0 0.0
    %2718 = vmatpush2.msra.mxu0 0.0
    %2719 = vmatprep.subr.mxu0 0.0
    %2720 = vmatpush2.msra.mxu0 0.0
    %2721 = vmatprep.subr.mxu0 0.0
    %2722 = vmatpush2.msra.mxu0 0.0
    %2723 = vmatprep.subr.mxu0 0.0
    %2724 = vmatpush2.msra.mxu0 0.0
    %2725 = vmatprep.subr.mxu0 0.0
    %2726 = vmatpush2.msra.mxu0 0.0
    %2727 = vmatprep.subr.mxu0 0.0
    %2728 = vmatpush2.msra.mxu0 0.0
    %2729 = vmatprep.subr.mxu0 0.0
    %2730 = vmatpush2.msra.mxu0 0.0
    %2731 = vmatprep.subr.mxu0 0.0
    %2732 = vmatpush2.msra.mxu0 0.0
    %2733 = vmatprep.subr.mxu0 0.0
    %2734 = vmatpush2.msra.mxu0 0.0
    %2735 = vmatprep.subr.mxu0 0.0
    %2736 = vmatpush2.msra.mxu0 0.0
    %2737 = vmatprep.subr.mxu0 0.0
    %2738 = vmatpush2.msra.mxu0 0.0
    %2739 = vmatprep.subr.mxu0 0.0
    %2740 = vmatpush2.msra.mxu0 0.0
    %2741 = vmatprep.subr.mxu0 0.0
    %2742 = vmatpush2.msra.mxu0 0.0
    %2743 = vmatprep.subr.mxu0 0.0
    %2744 = vmatpush2.msra.mxu0 0.0
    %2745 = vmatprep.mubr.f32.mxu0 0.0
    %2746 = vmatmul.mubr.f32.gmra.mxu0 %v2467
    %v2747 = vpop.f32.mrf.mxu0
    %v2748 = vadd.f32 %v2678, %v2747
    %v2749 = vpop.f32.mrf.mxu0
    %2750 = vdwg.mxu0
    %v2754 = vrot.slane %v2607, 2
    %v2755 = vrot.slane %v2609, 2
    %v2756 = vrot.slane %v2748, 2
    %v2760 = vadd.f32 %v149, %v2754
    %v2761 = vadd.f32 %v151, %v2755
    %v2762 = vadd.f32 %v225, %v2756
    %v2763 = vtanh.pop %v2760
    %v2764 = vtanh.pop %v2761
    %v2765 = vtanh.pop %v2762
    %v2766 = vld [vmem:[%s4] sm:$0xff]
    %v2767 = vld [vmem:[%s4 + $0x8] sm:$0xff]
    %v2768 = vld [vmem:[%s4 + $0x10] sm:$0xff]
    %v2769 = vld [vmem:[%s4 + $0x18] sm:$0xff]
    %v2770 = vld [vmem:[%s4 + $0x20] sm:$0xff]
    %v2771 = vld [vmem:[%s4 + $0x28] sm:$0xff]
    %v2772 = vld [vmem:[%s4 + $0x30] sm:$0xff]
    %v2773 = vld [vmem:[%s4 + $0x38] sm:$0xff]
    %v2774 = vld [vmem:[%s4 + $0x40] sm:$0xff]
    %v2775 = vld [vmem:[%s4 + $0x48] sm:$0xff]
    %v2776 = vld [vmem:[%s4 + $0x50] sm:$0xff]
    %v2777 = vld [vmem:[%s4 + $0x58] sm:$0xff]
    %v2778 = vld [vmem:[%s4 + $0x60] sm:$0xff]
    %v2779 = vld [vmem:[%s4 + $0x68] sm:$0xff]
    %v2780 = vld [vmem:[%s4 + $0x70] sm:$0xff]
    %v2781 = vld [vmem:[%s4 + $0x78] sm:$0xff]
    %v2782 = vld [vmem:[%s4 + $0x80] sm:$0xff]
    %v2783 = vld [vmem:[%s4 + $0x88] sm:$0xff]
    %v2784 = vld [vmem:[%s4 + $0x90] sm:$0xff]
    %v2785 = vld [vmem:[%s4 + $0x98] sm:$0xff]
    %v2786 = vld [vmem:[%s4 + $0xa0] sm:$0xff]
    %v2787 = vld [vmem:[%s4 + $0xa8] sm:$0xff]
    %v2788 = vld [vmem:[%s4 + $0xb0] sm:$0xff]
    %v2789 = vld [vmem:[%s4 + $0xb8] sm:$0xff]
    %v2790 = vld [vmem:[%s4 + $0xc0] sm:$0xff]
    %v2791 = vld [vmem:[%s4 + $0xc8] sm:$0xff]
    %v2792 = vld [vmem:[%s4 + $0xd0] sm:$0xff]
    %v2793 = vld [vmem:[%s4 + $0xd8] sm:$0xff]
    %v2794 = vld [vmem:[%s4 + $0xe0] sm:$0xff]
    %v2795 = vld [vmem:[%s4 + $0xe8] sm:$0xff]
    %v2796 = vld [vmem:[%s4 + $0xf0] sm:$0xff]
    %v2797 = vld [vmem:[%s4 + $0xf8] sm:$0xff]
    %v2798 = vld [vmem:[%s4 + $0x100] sm:$0xff]
    %v2799 = vld [vmem:[%s4 + $0x108] sm:$0xff]
    %v2800 = vld [vmem:[%s4 + $0x110] sm:$0xff]
    %v2801 = vld [vmem:[%s4 + $0x118] sm:$0xff]
    %v2802 = vld [vmem:[%s4 + $0x120] sm:$0xff]
    %v2803 = vld [vmem:[%s4 + $0x128] sm:$0xff]
    %v2804 = vld [vmem:[%s4 + $0x130] sm:$0xff]
    %v2805 = vld [vmem:[%s4 + $0x138] sm:$0xff]
    %v2806 = vld [vmem:[%s5] sm:$0x1]
    %v2808 = vlaneseq
    %v2809 = vshrl.u32 %v2808, 7
    %v2810 = vsub.s32 0, %v2809
    %v2811 = vrot.slane %v2806, %v2810
    %v2816 = vrot.slane %v2763, 6
    %v2817 = vrot.slane %v2764, 6
    %v2818 = vrot.slane %v2765, 6
    %v2821 = vsel %vm348, %v2818, 0
    %2823 = vmatprep.subr.mxu0 0.0
    %2824 = vmatpush1.msra.mxu0 %v2781
    %2825 = vmatprep.subr.mxu0 0.0
    %2826 = vmatpush1.msra.mxu0 %v2780
    %2827 = vmatprep.subr.mxu0 0.0
    %2828 = vmatpush1.msra.mxu0 %v2779
    %2829 = vmatprep.subr.mxu0 0.0
    %2830 = vmatpush1.msra.mxu0 %v2778
    %2831 = vmatprep.subr.mxu0 0.0
    %2832 = vmatpush1.msra.mxu0 %v2777
    %2833 = vmatprep.subr.mxu0 0.0
    %2834 = vmatpush1.msra.mxu0 %v2776
    %2835 = vmatprep.subr.mxu0 0.0
    %2836 = vmatpush1.msra.mxu0 %v2775
    %2837 = vmatprep.subr.mxu0 0.0
    %2838 = vmatpush1.msra.mxu0 %v2774
    %2839 = vmatprep.subr.mxu0 0.0
    %2840 = vmatpush1.msra.mxu0 %v2773
    %2841 = vmatprep.subr.mxu0 0.0
    %2842 = vmatpush1.msra.mxu0 %v2772
    %2843 = vmatprep.subr.mxu0 0.0
    %2844 = vmatpush1.msra.mxu0 %v2771
    %2845 = vmatprep.subr.mxu0 0.0
    %2846 = vmatpush1.msra.mxu0 %v2770
    %2847 = vmatprep.subr.mxu0 0.0
    %2848 = vmatpush1.msra.mxu0 %v2769
    %2849 = vmatprep.subr.mxu0 0.0
    %2850 = vmatpush1.msra.mxu0 %v2768
    %2851 = vmatprep.subr.mxu0 0.0
    %2852 = vmatpush1.msra.mxu0 %v2767
    %2853 = vmatprep.subr.mxu0 0.0
    %2854 = vmatpush1.msra.mxu0 %v2766
    %2855 = vmatprep.subr.mxu0 0.0
    %2856 = vmatpush2.msra.mxu0 %v2797
    %2857 = vmatprep.subr.mxu0 0.0
    %2858 = vmatpush2.msra.mxu0 %v2796
    %2859 = vmatprep.subr.mxu0 0.0
    %2860 = vmatpush2.msra.mxu0 %v2795
    %2861 = vmatprep.subr.mxu0 0.0
    %2862 = vmatpush2.msra.mxu0 %v2794
    %2863 = vmatprep.subr.mxu0 0.0
    %2864 = vmatpush2.msra.mxu0 %v2793
    %2865 = vmatprep.subr.mxu0 0.0
    %2866 = vmatpush2.msra.mxu0 %v2792
    %2867 = vmatprep.subr.mxu0 0.0
    %2868 = vmatpush2.msra.mxu0 %v2791
    %2869 = vmatprep.subr.mxu0 0.0
    %2870 = vmatpush2.msra.mxu0 %v2790
    %2871 = vmatprep.subr.mxu0 0.0
    %2872 = vmatpush2.msra.mxu0 %v2789
    %2873 = vmatprep.subr.mxu0 0.0
    %2874 = vmatpush2.msra.mxu0 %v2788
    %2875 = vmatprep.subr.mxu0 0.0
    %2876 = vmatpush2.msra.mxu0 %v2787
    %2877 = vmatprep.subr.mxu0 0.0
    %2878 = vmatpush2.msra.mxu0 %v2786
    %2879 = vmatprep.subr.mxu0 0.0
    %2880 = vmatpush2.msra.mxu0 %v2785
    %2881 = vmatprep.subr.mxu0 0.0
    %2882 = vmatpush2.msra.mxu0 %v2784
    %2883 = vmatprep.subr.mxu0 0.0
    %2884 = vmatpush2.msra.mxu0 %v2783
    %2885 = vmatprep.subr.mxu0 0.0
    %2886 = vmatpush2.msra.mxu0 %v2782
    %2887 = vmatprep.mubr.f32.mxu0 %v2817
    %2888 = vmatmul.mubr.f32.gmra.mxu0 %v2816
    %v2889 = vpop.f32.mrf.mxu0
    %v2890 = vadd.f32 %v2811, %v2889
    %v2891 = vpop.f32.mrf.mxu0
    %2892 = vdwg.mxu0
    %2893 = vmatprep.subr.mxu0 0.0
    %2894 = vmatpush1.msra.mxu0 0.0
    %2895 = vmatprep.subr.mxu0 0.0
    %2896 = vmatpush1.msra.mxu0 0.0
    %2897 = vmatprep.subr.mxu0 0.0
    %2898 = vmatpush1.msra.mxu0 0.0
    %2899 = vmatprep.subr.mxu0 0.0
    %2900 = vmatpush1.msra.mxu0 0.0
    %2901 = vmatprep.subr.mxu0 0.0
    %2902 = vmatpush1.msra.mxu0 0.0
    %2903 = vmatprep.subr.mxu0 0.0
    %2904 = vmatpush1.msra.mxu0 0.0
    %2905 = vmatprep.subr.mxu0 0.0
    %2906 = vmatpush1.msra.mxu0 0.0
    %2907 = vmatprep.subr.mxu0 0.0
    %2908 = vmatpush1.msra.mxu0 0.0
    %2909 = vmatprep.subr.mxu0 0.0
    %2910 = vmatpush1.msra.mxu0 %v2805
    %2911 = vmatprep.subr.mxu0 0.0
    %2912 = vmatpush1.msra.mxu0 %v2804
    %2913 = vmatprep.subr.mxu0 0.0
    %2914 = vmatpush1.msra.mxu0 %v2803
    %2915 = vmatprep.subr.mxu0 0.0
    %2916 = vmatpush1.msra.mxu0 %v2802
    %2917 = vmatprep.subr.mxu0 0.0
    %2918 = vmatpush1.msra.mxu0 %v2801
    %2919 = vmatprep.subr.mxu0 0.0
    %2920 = vmatpush1.msra.mxu0 %v2800
    %2921 = vmatprep.subr.mxu0 0.0
    %2922 = vmatpush1.msra.mxu0 %v2799
    %2923 = vmatprep.subr.mxu0 0.0
    %2924 = vmatpush1.msra.mxu0 %v2798
    %2925 = vmatprep.subr.mxu0 0.0
    %2926 = vmatpush2.msra.mxu0 0.0
    %2927 = vmatprep.subr.mxu0 0.0
    %2928 = vmatpush2.msra.mxu0 0.0
    %2929 = vmatprep.subr.mxu0 0.0
    %2930 = vmatpush2.msra.mxu0 0.0
    %2931 = vmatprep.subr.mxu0 0.0
    %2932 = vmatpush2.msra.mxu0 0.0
    %2933 = vmatprep.subr.mxu0 0.0
    %2934 = vmatpush2.msra.mxu0 0.0
    %2935 = vmatprep.subr.mxu0 0.0
    %2936 = vmatpush2.msra.mxu0 0.0
    %2937 = vmatprep.subr.mxu0 0.0
    %2938 = vmatpush2.msra.mxu0 0.0
    %2939 = vmatprep.subr.mxu0 0.0
    %2940 = vmatpush2.msra.mxu0 0.0
    %2941 = vmatprep.subr.mxu0 0.0
    %2942 = vmatpush2.msra.mxu0 0.0
    %2943 = vmatprep.subr.mxu0 0.0
    %2944 = vmatpush2.msra.mxu0 0.0
    %2945 = vmatprep.subr.mxu0 0.0
    %2946 = vmatpush2.msra.mxu0 0.0
    %2947 = vmatprep.subr.mxu0 0.0
    %2948 = vmatpush2.msra.mxu0 0.0
    %2949 = vmatprep.subr.mxu0 0.0
    %2950 = vmatpush2.msra.mxu0 0.0
    %2951 = vmatprep.subr.mxu0 0.0
    %2952 = vmatpush2.msra.mxu0 0.0
    %2953 = vmatprep.subr.mxu0 0.0
    %2954 = vmatpush2.msra.mxu0 0.0
    %2955 = vmatprep.subr.mxu0 0.0
    %2956 = vmatpush2.msra.mxu0 0.0
    %2957 = vmatprep.mubr.f32.mxu0 0.0
    %2958 = vmatmul.mubr.f32.gmra.mxu0 %v2821
    %v2959 = vpop.f32.mrf.mxu0
    %v2960 = vadd.f32 %v2890, %v2959
    %v2961 = vpop.f32.mrf.mxu0
    %2962 = vdwg.mxu0
    %vm2963 = vcmask 25600
    %v2964 = vsel %vm2963, %v2960, -inf
    %2965 = vmax.xlane.f32.xlu0 %v2964
    %v2966 = vpop.xlane.xlu0 %2965
    %v2967 = vsub.f32 %v2960, %v2966
    %v2968 = vmul.f32 %v2967, 1.442695
    %v2969 = vpow.pop %v2968
    %v2970 = vsel %vm2963, %v2969, 0.0
    %2971 = vadd.xlane.f32.xlu0 %v2970
    %v2972 = vpop.xlane.xlu0 %2971
    %v2973 = vrcp.pop %v2972
    %v2974 = vmul.f32 %v2969, %v2973
    %2975 = vst.msk [vmem:[#allocation5] sm:$0x3] %vm2963, %v2974
    // Predicated region
    $region30: #{tpu_custom_call.1} parent=1 // pred_check
      _
    $region31: #{tpu_custom_call.1} parent=1 // pred_check_branch
      %2977 = sbr.rel (0) target = $region33
    $region32: #{tpu_custom_call.1} parent=1 // pred_region
      %s2979 = ssub.s32 32, 32
      %2980 = vsyncadd [#allocation4], %s2979
      %s2982 = sshll.u32 [#allocation5], 4
      %s2983 = int_to_ptr.vmem [resolvable:$true] %s2982
      %2985 = dma.vmem_to_hbm [thread:$0]  %s2983, 32, %s6, [#allocation4]
    $region33: #{tpu_custom_call.1} parent=1 // pred_fallthru
      _
    // Predicated region
    $region34: #{tpu_custom_call.1} parent=1 // pred_check
      _
    $region35: #{tpu_custom_call.1} parent=1 // pred_check_branch
      %2987 = sbr.rel (0) target = $region37
    $region36: #{tpu_custom_call.1} parent=1 // pred_region
      %2988 = dma.done [#allocation4], 32
    $region37: #{tpu_custom_call.1} parent=1 // pred_fallthru
      _
    %2989 = vsyncpa [#allocation3], 1
    %2990 = vsyncpa [#allocation4], 1

</llo_original>
